<compile_context>
chip_gen: v6e
topology: v6e:2x2x1
jax: 0.10.0
libtpu: 0.0.40
codegen_flags: <defaults>
</compile_context>

<pallas_src>
import functools
import math

import jax
import jax.numpy as jnp
from jax.experimental import pallas as pl
from jax.experimental.pallas import tpu as pltpu


def _round_up(x, m):
    return (x + m - 1) // m * m


# ----------------------------- stem Pallas kernel ---------------------------

def _stem_matmul_relu_kernel(p_ref, w_ref, o_ref):
    # (TM, K) @ (K, 64) on the MXU (BN scale pre-folded into w), then ReLU.
    acc = jnp.dot(p_ref[...], w_ref[...], preferred_element_type=jnp.float32)
    o_ref[...] = jnp.maximum(acc, 0.0).astype(o_ref.dtype)


def stem_conv(patches, w_mat, *, tm):
    m_pad, kdim = patches.shape
    cout = w_mat.shape[1]
    return pl.pallas_call(
        _stem_matmul_relu_kernel,
        out_shape=jax.ShapeDtypeStruct((m_pad, cout), jnp.bfloat16),
        grid=(m_pad // tm,),
        in_specs=[pl.BlockSpec((tm, kdim), lambda i: (i, 0)),
                  pl.BlockSpec((kdim, cout), lambda i: (0, 0))],
        out_specs=pl.BlockSpec((tm, cout), lambda i: (i, 0)),
        compiler_params=pltpu.CompilerParams(dimension_semantics=("parallel",)),
    )(patches, w_mat)


# ----------------- fused maxpool + layer2 + avgpool + fc kernel -------------

def _tail_kernel(ee_ref, eo_ref, oe_ref, oo_ref,
                 wa_ref, wb_ref, bb_ref, wfc_ref, bfc_ref,
                 feat_ref, log_ref,
                 x_ref, ya_ref,
                 *, g, hp, wp, wr, p_pad, ncls_pad, inv_area):
    c = ee_ref.shape[-1]                       # 64
    blk = g * p_pad
    rstart = wr + 1                            # flat offset of 1st interior pixel
    rv = blk - 2 * (wr + 1)                    # rows for which all taps are in-block
    rv2 = rv + 2

    # ---- MaxPool2d(3, s2, p1): max of 9 taps from the 4 parity planes -------
    def sl(ref, a, b):
        return ref[:, a:a + hp, b:b + wp, :]

    m = sl(ee_ref, 0, 0)
    for t in (sl(eo_ref, 0, 0), sl(ee_ref, 0, 1),
              sl(oe_ref, 0, 0), sl(oo_ref, 0, 0), sl(oe_ref, 0, 1),
              sl(ee_ref, 1, 0), sl(eo_ref, 1, 0), sl(ee_ref, 1, 1)):
        m = jnp.maximum(m, t)
    m = m.astype(jnp.float32)                  # (g, hp, wp, c)

    # ---- build zero-padded flat layout in registers, single dense VMEM store
    zl = jnp.zeros((g, hp, 1, c), jnp.float32)
    zr = jnp.zeros((g, hp, wr - 1 - wp, c), jnp.float32)
    rows = jnp.concatenate([zl, m, zr], axis=2)            # (g, hp, wr, c)
    zrow = jnp.zeros((g, 1, wr, c), jnp.float32)
    img = jnp.concatenate([zrow, rows, zrow], axis=1)      # (g, hp+2, wr, c)
    img = img.reshape(g, (hp + 2) * wr, c)
    tail = p_pad - (hp + 2) * wr
    if tail > 0:
        img = jnp.concatenate(
            [img, jnp.zeros((g, tail, c), jnp.float32)], axis=1)
    x_ref[...] = img.reshape(blk, c).astype(x_ref.dtype)

    # ---- interior mask generated in-kernel (no HBM mask input) --------------
    ri = (jax.lax.broadcasted_iota(jnp.int32, (rv, 1), 0)
          .astype(jnp.float32) + float(rstart))
    q = ri - float(p_pad) * jnp.floor(ri / float(p_pad))   # position in image
    iy = jnp.floor(q / float(wr))
    ix = q - float(wr) * iy
    interior = ((iy >= 1.0) & (iy <= float(hp)) &
                (ix >= 1.0) & (ix <= float(wp)))
    mask = interior.astype(jnp.float32)                    # (rv, 1)

    # ---- 3x3 conv as 3 wide MXU matmuls (dx taps stacked along N=192) -------
    def conv3x3(src_ref, w_ref):
        acc = jnp.zeros((rv, c), jnp.float32)
        for dy in range(3):
            xs = src_ref[dy * wr:dy * wr + rv2, :]             # aligned load
            y = jnp.dot(xs, w_ref[dy * c:(dy + 1) * c, :],
                        preferred_element_type=jnp.float32)    # (rv2, 3c)
            acc = (acc + y[0:rv, 0:c]
                   + y[1:1 + rv, c:2 * c]
                   + y[2:2 + rv, 2 * c:3 * c])
        return acc

    zhead = jnp.zeros((rstart, c), jnp.float32)
    ztail = jnp.zeros((blk - rstart - rv, c), jnp.float32)

    # conv_a (no bias, BN scale folded) + ReLU -> VMEM scratch (bf16)
    acc_a = conv3x3(x_ref, wa_ref)
    ya = jnp.maximum(acc_a, 0.0) * mask
    ya_ref[...] = jnp.concatenate([zhead, ya, ztail], axis=0).astype(ya_ref.dtype)

    # conv_b (+folded bias) + residual + ReLU, masked back to padded-flat
    acc_b = conv3x3(ya_ref, wb_ref)
    res = x_ref[rstart:rstart + rv, :].astype(jnp.float32)
    out = jnp.maximum(acc_b + bb_ref[...] + res, 0.0) * mask     # (rv, c) f32

    feat_ref[...] = jnp.concatenate(
        [zhead, out, ztail], axis=0).astype(feat_ref.dtype)      # one dense store

    # ---- AdaptiveAvgPool2d((1,1)) + Linear epilogue (fused) -----------------
    pooled = []
    for gi in range(g):
        lo = max(0, gi * p_pad - rstart)
        hi = min(rv, (gi + 1) * p_pad - rstart)
        pooled.append(jnp.sum(out[lo:hi, :], axis=0, keepdims=True))
    pooled = jnp.concatenate(pooled, axis=0) * inv_area          # (g, c) f32
    logits = (jnp.dot(pooled, wfc_ref[...], preferred_element_type=jnp.float32)
              + bfc_ref[...])
    log_ref[...] = logits.reshape(1, g, ncls_pad)


def tail_block(ee, eo, oe, oo, wa, wb, bb, wfc, bfc,
               *, g, hp, wp, wr, p_pad, ncls_pad):
    n_pad = ee.shape[0]
    c = ee.shape[-1]
    steps = n_pad // g
    blk = g * p_pad
    inv_area = 1.0 / float(hp * wp)

    phase_spec = pl.BlockSpec((g, hp + 1, wp + 1, c), lambda i: (i, 0, 0, 0))

    def full(shape):
        return pl.BlockSpec(shape, lambda i: (0, 0))

    return pl.pallas_call(
        functools.partial(_tail_kernel, g=g, hp=hp, wp=wp, wr=wr, p_pad=p_pad,
                          ncls_pad=ncls_pad, inv_area=inv_area),
        out_shape=(jax.ShapeDtypeStruct((n_pad * p_pad, c), jnp.bfloat16),
                   jax.ShapeDtypeStruct((steps, g, ncls_pad), jnp.float32)),
        grid=(steps,),
        in_specs=[phase_spec, phase_spec, phase_spec, phase_spec,
                  full(wa.shape), full(wb.shape), full(bb.shape),
                  full(wfc.shape), full(bfc.shape)],
        out_specs=(pl.BlockSpec((blk, c), lambda i: (i, 0)),
                   pl.BlockSpec((1, g, ncls_pad), lambda i: (i, 0, 0))),
        scratch_shapes=[pltpu.VMEM((blk, c), jnp.bfloat16),   # padded-flat x
                        pltpu.VMEM((blk, c), jnp.bfloat16)],  # intermediate ya
        compiler_params=pltpu.CompilerParams(dimension_semantics=("parallel",)),
    )(ee, eo, oe, oo, wa, wb, bb, wfc, bfc)


# ------------------------------ JAX-side glue --------------------------------

def _im2col(x, k, stride, pad):
    # Tiny stem only (Cin=3): NHWC -> (N*Ho*Wo, k*k*C), patch order (dy, dx, c).
    n, h, w, c = x.shape
    xp = jnp.pad(x, ((0, 0), (pad, pad), (pad, pad), (0, 0)))
    ho = (h + 2 * pad - k) // stride + 1
    wo = (w + 2 * pad - k) // stride + 1
    cols = []
    for dy in range(k):
        for dx in range(k):
            cols.append(xp[:, dy:dy + stride * ho:stride,
                           dx:dx + stride * wo:stride, :])
    patches = jnp.stack(cols, axis=3)                 # (N, Ho, Wo, 9, C)
    return patches.reshape(n * ho * wo, k * k * c), ho, wo


def init_params(key, num_classes=10):
    ks = jax.random.split(key, 6)
    eps = 1e-5
    bn_scale = 1.0 / math.sqrt(1.0 + eps)   # fresh BN stats: gamma=1, beta=0
    ncls_pad = _round_up(num_classes, 128)

    def conv_w(k, cout, cin, kh=3, kw=3):
        std = math.sqrt(2.0 / (kh * kw * cout))       # PyTorch init loop
        return std * jax.random.normal(k, (cout, cin, kh, kw), jnp.float32)

    w1 = conv_w(ks[0], 64, 3)          # layer1 conv (3->64, s2, p3, no bias)
    w2 = conv_w(ks[1], 64, 64)         # layer2 conv #1 (no bias)
    w3 = conv_w(ks[2], 64, 64)         # layer2 conv #2 (has bias)
    fan3 = 64 * 3 * 3
    b3 = jax.random.uniform(ks[3], (64,), jnp.float32,
                            -1.0 / math.sqrt(fan3), 1.0 / math.sqrt(fan3))

    # Stem weight: (Cout,Cin,kh,kw) -> (kh*kw*Cin, Cout), fold BN, pad K, bf16.
    w1c = jnp.transpose(w1, (2, 3, 1, 0)).reshape(-1, 64) * bn_scale
    kp = _round_up(w1c.shape[0], 8)
    w1c = jnp.pad(w1c, ((0, kp - w1c.shape[0]), (0, 0))).astype(jnp.bfloat16)

    def stack_taps(w_oihw):
        # rows = dy*64 + cin, cols = dx*64 + cout  -> (192, 192)
        return jnp.transpose(w_oihw, (2, 1, 3, 0)).reshape(3 * 64, 3 * 64)

    wa = (stack_taps(w2) * bn_scale).astype(jnp.bfloat16)
    wb = (stack_taps(w3) * bn_scale).astype(jnp.bfloat16)
    bb = (bn_scale * b3).reshape(1, 64).astype(jnp.float32)   # conv bias thru BN

    fan_fc = 64
    wfc = jax.random.uniform(ks[4], (64, num_classes), jnp.float32,
                             -1.0 / math.sqrt(fan_fc), 1.0 / math.sqrt(fan_fc))
    bfc = jax.random.uniform(ks[5], (num_classes,), jnp.float32,
                             -1.0 / math.sqrt(fan_fc), 1.0 / math.sqrt(fan_fc))
    wfc = jnp.pad(wfc, ((0, 0), (0, ncls_pad - num_classes)))
    bfc = jnp.pad(bfc.reshape(1, num_classes),
                  ((0, 0), (0, ncls_pad - num_classes)))
    return dict(w1=w1c, wa=wa, wb=wb, bb=bb, wfc=wfc, bfc=bfc)


def resnet18_client_forward(x_nchw, params, *, num_classes=10):
    n = x_nchw.shape[0]
    # Adaptive images-per-step: keep >= 2 grid steps at small batch (pipelining
    # + both v7x TensorCores), up to 8 images per step at larger batch.
    g = max(1, min(8, n // 2))
    n_pad = _round_up(n, g)
    x = jnp.transpose(x_nchw, (0, 2, 3, 1)).astype(jnp.bfloat16)   # NCHW -> NHWC
    if n_pad != n:
        x = jnp.pad(x, ((0, n_pad - n), (0, 0), (0, 0), (0, 0)))

    # ---- layer1: Conv(3->64, s2, p3) + BN + ReLU (tiled Pallas matmul) ------
    # TODO(synk): fuse the im2col into the stem kernel for ImageNet-scale inputs.
    patches, h1, w1 = _im2col(x, 3, 2, 3)
    m_rows, kdim = patches.shape
    kp = _round_up(kdim, 8)
    nb = max(2, pl.cdiv(m_rows, 2048))           # >=2 row tiles, large tiles
    tm = _round_up(pl.cdiv(m_rows, nb), 16)
    m_pad = tm * nb
    patches = jnp.pad(patches, ((0, m_pad - m_rows), (0, kp - kdim)))
    y1 = stem_conv(patches, params['w1'], tm=tm)[:m_rows]
    y1 = y1.reshape(n_pad, h1, w1, 64)

    # ---- maxpool phase split (zero pad is safe: post-ReLU activations >= 0) -
    hp = (h1 - 1) // 2 + 1
    wp = (w1 - 1) // 2 + 1
    he, we = 2 * hp + 2, 2 * wp + 2
    xe = jnp.pad(y1, ((0, 0), (1, he - 1 - h1), (1, we - 1 - w1), (0, 0)))
    ee = xe[:, 0::2, 0::2, :]
    eo = xe[:, 0::2, 1::2, :]
    oe = xe[:, 1::2, 0::2, :]
    oo = xe[:, 1::2, 1::2, :]

    # padded-flat layout constants (sublane-aligned row stride)
    wr = _round_up(wp + 2, 8)                 # flat row stride per image row
    p_pad = _round_up((hp + 2) * wr, 16)      # flat rows per image

    ncls_pad = params['wfc'].shape[1]
    feats_pf, logits_pad = tail_block(
        ee, eo, oe, oo, params['wa'], params['wb'], params['bb'],
        params['wfc'], params['bfc'],
        g=g, hp=hp, wp=wp, wr=wr, p_pad=p_pad, ncls_pad=ncls_pad)

    logits = logits_pad.reshape(n_pad, ncls_pad)[:n, :num_classes]

    # ---- extracted features back to PyTorch NCHW ----------------------------
    feats = feats_pf.reshape(n_pad, p_pad, 64)[:n, :(hp + 2) * wr, :]
    feats = feats.reshape(n, hp + 2, wr, 64)[:, 1:hp + 1, 1:wp + 1, :]
    feats = jnp.transpose(feats, (0, 3, 1, 2)).astype(jnp.float32)
    return logits, feats


if __name__ == "__main__":
    key = jax.random.PRNGKey(0)
    kx, kp_ = jax.random.split(key)
    # Small NCHW 3-channel input consistent with the module.
    x = jax.random.normal(kx, (2, 3, 16, 16), jnp.float32)
    params = init_params(kp_, num_classes=10)

    fwd = jax.jit(functools.partial(resnet18_client_forward, num_classes=10))
    logits, feats = fwd(x, params)
    jax.block_until_ready((logits, feats))

    assert logits.shape == (2, 10), logits.shape
    assert feats.shape == (2, 64, 5, 5), feats.shape  # 16 -> conv s2 p3 -> 10 -> pool -> 5
    print("KERNEL_OK")
</pallas_src>

<mosaic_0001>
module attributes {stable_mosaic.version = 11 : i64} {
  func.func @_stem_matmul_relu_kernel(%arg0: i32, %arg1: memref<112x32xbf16, #tpu.memory_space<vmem>>, %arg2: memref<32x64xbf16, #tpu.memory_space<vmem>>, %arg3: memref<112x64xbf16, #tpu.memory_space<vmem>>) attributes {dimension_semantics = [#tpu.dimension_semantics<parallel>], iteration_bounds = array<i64: 2>, scalar_prefetch = 0 : i64, scratch_operands = 0 : i64, tpu.core_type = #tpu.core_type<tc>, window_params = [{transform_indices = @transform_0, window_bounds = array<i64: 112, 32>}, {pipeline_mode = #tpu.pipeline_mode<synchronous>, transform_indices = @transform_1, window_bounds = array<i64: 32, 64>}, {transform_indices = @transform_2, window_bounds = array<i64: 112, 64>}]} {
    %c0 = arith.constant 0 : index
    %c0_0 = arith.constant 0 : index
    %0 = vector.load %arg1[%c0, %c0_0] : memref<112x32xbf16, #tpu.memory_space<vmem>>, vector<112x32xbf16>
    %c0_1 = arith.constant 0 : index
    %c0_2 = arith.constant 0 : index
    %1 = vector.load %arg2[%c0_1, %c0_2] : memref<32x64xbf16, #tpu.memory_space<vmem>>, vector<32x64xbf16>
    %cst = arith.constant dense<0.000000e+00> : vector<112x64xf32>
    %2 = tpu.matmul %0, %1, %cst {dimension_numbers = #tpu.dot_dimension_numbers<[1], [0], [0], [1], [0, 0, 1, 1], [], []>} : vector<112x32xbf16>, vector<32x64xbf16>, vector<112x64xf32> -> vector<112x64xf32>
    %cst_3 = arith.constant 0.000000e+00 : f32
    %3 = vector.broadcast %cst_3 : f32 to vector<112x64xf32>
    %4 = arith.maximumf %2, %3 : vector<112x64xf32>
    %5 = arith.truncf %4 : vector<112x64xf32> to vector<112x64xbf16>
    %c0_4 = arith.constant 0 : index
    %c0_5 = arith.constant 0 : index
    %6 = vector.load %arg3[%c0_4, %c0_5] : memref<112x64xbf16, #tpu.memory_space<vmem>>, vector<112x64xbf16>
    tpu.vector_store %arg3[%c0_4, %c0_5], %5 {strides = array<i32>} : memref<112x64xbf16, #tpu.memory_space<vmem>>, vector<112x64xbf16>,
    return
  }
  func.func @transform_0(%arg0: i32) -> (i32, i32) {
    %c0_i32 = arith.constant 0 : i32
    %c0_i32_0 = arith.constant 0 : i32
    return %arg0, %c0_i32 : i32, i32
  }
  func.func @transform_1(%arg0: i32) -> (i32, i32) {
    %c0_i32 = arith.constant 0 : i32
    %c0_i32_0 = arith.constant 0 : i32
    %c0_i32_1 = arith.constant 0 : i32
    return %c0_i32, %c0_i32_0 : i32, i32
  }
  func.func @transform_2(%arg0: i32) -> (i32, i32) {
    %c0_i32 = arith.constant 0 : i32
    %c0_i32_0 = arith.constant 0 : i32
    return %arg0, %c0_i32 : i32, i32
  }
}

module attributes {stable_mosaic.version = 11 : i64} {
  func.func @_tail_kernel(%arg0: i32, %arg1: memref<1x6x6x64xbf16, #tpu.memory_space<vmem>>, %arg2: memref<1x6x6x64xbf16, #tpu.memory_space<vmem>>, %arg3: memref<1x6x6x64xbf16, #tpu.memory_space<vmem>>, %arg4: memref<1x6x6x64xbf16, #tpu.memory_space<vmem>>, %arg5: memref<192x192xbf16, #tpu.memory_space<vmem>>, %arg6: memref<192x192xbf16, #tpu.memory_space<vmem>>, %arg7: memref<1x64xf32, #tpu.memory_space<vmem>>, %arg8: memref<64x128xf32, #tpu.memory_space<vmem>>, %arg9: memref<1x128xf32, #tpu.memory_space<vmem>>, %arg10: memref<64x64xbf16, #tpu.memory_space<vmem>>, %arg11: memref<1x1x128xf32, #tpu.memory_space<vmem>>, %arg12: memref<64x64xbf16, #tpu.memory_space<vmem>>, %arg13: memref<64x64xbf16, #tpu.memory_space<vmem>>) attributes {dimension_semantics = [#tpu.dimension_semantics<parallel>], iteration_bounds = array<i64: 2>, scalar_prefetch = 0 : i64, scratch_operands = 2 : i64, tpu.core_type = #tpu.core_type<tc>, window_params = [{transform_indices = @transform_0, window_bounds = array<i64: 1, 6, 6, 64>}, {transform_indices = @transform_1, window_bounds = array<i64: 1, 6, 6, 64>}, {transform_indices = @transform_2, window_bounds = array<i64: 1, 6, 6, 64>}, {transform_indices = @transform_3, window_bounds = array<i64: 1, 6, 6, 64>}, {pipeline_mode = #tpu.pipeline_mode<synchronous>, transform_indices = @transform_4, window_bounds = array<i64: 192, 192>}, {pipeline_mode = #tpu.pipeline_mode<synchronous>, transform_indices = @transform_5, window_bounds = array<i64: 192, 192>}, {pipeline_mode = #tpu.pipeline_mode<synchronous>, transform_indices = @transform_6, window_bounds = array<i64: 1, 64>}, {pipeline_mode = #tpu.pipeline_mode<synchronous>, transform_indices = @transform_7, window_bounds = array<i64: 64, 128>}, {pipeline_mode = #tpu.pipeline_mode<synchronous>, transform_indices = @transform_8, window_bounds = array<i64: 1, 128>}, {transform_indices = @transform_9, window_bounds = array<i64: 64, 64>}, {transform_indices = @transform_10, window_bounds = array<i64: 1, 1, 128>}]} {
    %c0 = arith.constant 0 : index
    %c0_0 = arith.constant 0 : index
    %c0_1 = arith.constant 0 : index
    %c0_2 = arith.constant 0 : index
    %0 = vector.load %arg1[%c0, %c0_0, %c0_1, %c0_2] : memref<1x6x6x64xbf16, #tpu.memory_space<vmem>>, vector<1x5x5x64xbf16>
    %c0_3 = arith.constant 0 : index
    %c0_4 = arith.constant 0 : index
    %c0_5 = arith.constant 0 : index
    %c0_6 = arith.constant 0 : index
    %1 = vector.load %arg2[%c0_3, %c0_4, %c0_5, %c0_6] : memref<1x6x6x64xbf16, #tpu.memory_space<vmem>>, vector<1x5x5x64xbf16>
    %c0_7 = arith.constant 0 : index
    %c0_8 = arith.constant 0 : index
    %c1 = arith.constant 1 : index
    %c0_9 = arith.constant 0 : index
    %2 = vector.load %arg1[%c0_7, %c0_8, %c1, %c0_9] : memref<1x6x6x64xbf16, #tpu.memory_space<vmem>>, vector<1x5x5x64xbf16>
    %c0_10 = arith.constant 0 : index
    %c0_11 = arith.constant 0 : index
    %c0_12 = arith.constant 0 : index
    %c0_13 = arith.constant 0 : index
    %3 = vector.load %arg3[%c0_10, %c0_11, %c0_12, %c0_13] : memref<1x6x6x64xbf16, #tpu.memory_space<vmem>>, vector<1x5x5x64xbf16>
    %c0_14 = arith.constant 0 : index
    %c0_15 = arith.constant 0 : index
    %c0_16 = arith.constant 0 : index
    %c0_17 = arith.constant 0 : index
    %4 = vector.load %arg4[%c0_14, %c0_15, %c0_16, %c0_17] : memref<1x6x6x64xbf16, #tpu.memory_space<vmem>>, vector<1x5x5x64xbf16>
    %c0_18 = arith.constant 0 : index
    %c0_19 = arith.constant 0 : index
    %c1_20 = arith.constant 1 : index
    %c0_21 = arith.constant 0 : index
    %5 = vector.load %arg3[%c0_18, %c0_19, %c1_20, %c0_21] : memref<1x6x6x64xbf16, #tpu.memory_space<vmem>>, vector<1x5x5x64xbf16>
    %c0_22 = arith.constant 0 : index
    %c1_23 = arith.constant 1 : index
    %c0_24 = arith.constant 0 : index
    %c0_25 = arith.constant 0 : index
    %6 = vector.load %arg1[%c0_22, %c1_23, %c0_24, %c0_25] : memref<1x6x6x64xbf16, #tpu.memory_space<vmem>>, vector<1x5x5x64xbf16>
    %c0_26 = arith.constant 0 : index
    %c1_27 = arith.constant 1 : index
    %c0_28 = arith.constant 0 : index
    %c0_29 = arith.constant 0 : index
    %7 = vector.load %arg2[%c0_26, %c1_27, %c0_28, %c0_29] : memref<1x6x6x64xbf16, #tpu.memory_space<vmem>>, vector<1x5x5x64xbf16>
    %c0_30 = arith.constant 0 : index
    %c1_31 = arith.constant 1 : index
    %c1_32 = arith.constant 1 : index
    %c0_33 = arith.constant 0 : index
    %8 = vector.load %arg1[%c0_30, %c1_31, %c1_32, %c0_33] : memref<1x6x6x64xbf16, #tpu.memory_space<vmem>>, vector<1x5x5x64xbf16>
    %9 = arith.maximumf %0, %1 : vector<1x5x5x64xbf16>
    %10 = arith.maximumf %9, %2 : vector<1x5x5x64xbf16>
    %11 = arith.maximumf %10, %3 : vector<1x5x5x64xbf16>
    %12 = arith.maximumf %11, %4 : vector<1x5x5x64xbf16>
    %13 = arith.maximumf %12, %5 : vector<1x5x5x64xbf16>
    %14 = arith.maximumf %13, %6 : vector<1x5x5x64xbf16>
    %15 = arith.maximumf %14, %7 : vector<1x5x5x64xbf16>
    %16 = arith.maximumf %15, %8 : vector<1x5x5x64xbf16>
    %17 = arith.extf %16 : vector<1x5x5x64xbf16> to vector<1x5x5x64xf32>
    %cst = arith.constant 0.000000e+00 : f32
    %18 = vector.broadcast %cst : f32 to vector<1x5x1x64xf32>
    %cst_34 = arith.constant 0.000000e+00 : f32
    %19 = vector.broadcast %cst_34 : f32 to vector<1x5x2x64xf32>
    %20 = tpu.concatenate %18, %17, %19 in 2 : vector<1x5x1x64xf32>, vector<1x5x5x64xf32>, vector<1x5x2x64xf32> -> vector<1x5x8x64xf32>
    %cst_35 = arith.constant 0.000000e+00 : f32
    %21 = vector.broadcast %cst_35 : f32 to vector<1x1x8x64xf32>
    %22 = tpu.concatenate %21, %20, %21 in 1 : vector<1x1x8x64xf32>, vector<1x5x8x64xf32>, vector<1x1x8x64xf32> -> vector<1x7x8x64xf32>
    %23 = vector.shape_cast %22 : vector<1x7x8x64xf32> to vector<1x56x64xf32>
    %cst_36 = arith.constant 0.000000e+00 : f32
    %24 = vector.broadcast %cst_36 : f32 to vector<1x8x64xf32>
    %25 = tpu.concatenate %23, %24 in 1 : vector<1x56x64xf32>, vector<1x8x64xf32> -> vector<1x64x64xf32>
    %26 = vector.shape_cast %25 : vector<1x64x64xf32> to vector<64x64xf32>
    %27 = arith.truncf %26 : vector<64x64xf32> to vector<64x64xbf16>
    %c0_37 = arith.constant 0 : index
    %c0_38 = arith.constant 0 : index
    %28 = vector.load %arg12[%c0_37, %c0_38] : memref<64x64xbf16, #tpu.memory_space<vmem>>, vector<64x64xbf16>
    tpu.vector_store %arg12[%c0_37, %c0_38], %27 {strides = array<i32>} : memref<64x64xbf16, #tpu.memory_space<vmem>>, vector<64x64xbf16>,
    %29 = tpu.iota {dimensions = array<i32: 0>} : vector<46x1xi32>
    %30 = arith.sitofp %29 : vector<46x1xi32> to vector<46x1xf32>
    %cst_39 = arith.constant 9.000000e+00 : f32
    %31 = vector.broadcast %cst_39 : f32 to vector<46x1xf32>
    %32 = arith.addf %30, %31 : vector<46x1xf32>
    %cst_40 = arith.constant 6.400000e+01 : f32
    %33 = vector.broadcast %cst_40 : f32 to vector<46x1xf32>
    %34 = arith.divf %32, %33 : vector<46x1xf32>
    %35 = math.floor %34 : vector<46x1xf32>
    %cst_41 = arith.constant 6.400000e+01 : f32
    %36 = vector.broadcast %cst_41 : f32 to vector<46x1xf32>
    %37 = arith.mulf %36, %35 : vector<46x1xf32>
    %38 = arith.subf %32, %37 : vector<46x1xf32>
    %cst_42 = arith.constant 8.000000e+00 : f32
    %39 = vector.broadcast %cst_42 : f32 to vector<46x1xf32>
    %40 = arith.divf %38, %39 : vector<46x1xf32>
    %41 = math.floor %40 : vector<46x1xf32>
    %cst_43 = arith.constant 8.000000e+00 : f32
    %42 = vector.broadcast %cst_43 : f32 to vector<46x1xf32>
    %43 = arith.mulf %42, %41 : vector<46x1xf32>
    %44 = arith.subf %38, %43 : vector<46x1xf32>
    %cst_44 = arith.constant 1.000000e+00 : f32
    %45 = vector.broadcast %cst_44 : f32 to vector<46x1xf32>
    %46 = arith.cmpf oge, %41, %45 : vector<46x1xf32>
    %cst_45 = arith.constant 5.000000e+00 : f32
    %47 = vector.broadcast %cst_45 : f32 to vector<46x1xf32>
    %48 = arith.cmpf ole, %41, %47 : vector<46x1xf32>
    %49 = arith.andi %46, %48 : vector<46x1xi1>
    %cst_46 = arith.constant 1.000000e+00 : f32
    %50 = vector.broadcast %cst_46 : f32 to vector<46x1xf32>
    %51 = arith.cmpf oge, %44, %50 : vector<46x1xf32>
    %52 = arith.andi %49, %51 : vector<46x1xi1>
    %cst_47 = arith.constant 5.000000e+00 : f32
    %53 = vector.broadcast %cst_47 : f32 to vector<46x1xf32>
    %54 = arith.cmpf ole, %44, %53 : vector<46x1xf32>
    %55 = arith.andi %52, %54 : vector<46x1xi1>
    %56 = arith.extui %55 : vector<46x1xi1> to vector<46x1xi32>
    %57 = arith.sitofp %56 : vector<46x1xi32> to vector<46x1xf32>
    %cst_48 = arith.constant 0.000000e+00 : f32
    %58 = vector.broadcast %cst_48 : f32 to vector<9x64xf32>
    %cst_49 = arith.constant 0.000000e+00 : f32
    %59 = vector.broadcast %cst_49 : f32 to vector<9x64xf32>
    %cst_50 = arith.constant 0.000000e+00 : f32
    %60 = vector.broadcast %cst_50 : f32 to vector<46x64xf32>
    %c0_51 = arith.constant 0 : index
    %c0_52 = arith.constant 0 : index
    %61 = vector.load %arg12[%c0_51, %c0_52] : memref<64x64xbf16, #tpu.memory_space<vmem>>, vector<48x64xbf16>
    %c0_53 = arith.constant 0 : index
    %c0_54 = arith.constant 0 : index
    %62 = vector.load %arg5[%c0_53, %c0_54] : memref<192x192xbf16, #tpu.memory_space<vmem>>, vector<64x192xbf16>
    %cst_55 = arith.constant dense<0.000000e+00> : vector<48x192xf32>
    %63 = tpu.matmul %61, %62, %cst_55 {dimension_numbers = #tpu.dot_dimension_numbers<[1], [0], [0], [1], [0, 0, 1, 1], [], []>} : vector<48x64xbf16>, vector<64x192xbf16>, vector<48x192xf32> -> vector<48x192xf32>
    %64 = vector.extract_strided_slice %63 {offsets = [0, 0], sizes = [46, 64], strides = [1, 1]} : vector<48x192xf32> to vector<46x64xf32>
    %65 = arith.addf %60, %64 : vector<46x64xf32>
    %66 = vector.extract_strided_slice %63 {offsets = [1, 64], sizes = [46, 64], strides = [1, 1]} : vector<48x192xf32> to vector<46x64xf32>
    %67 = arith.addf %65, %66 : vector<46x64xf32>
    %68 = vector.extract_strided_slice %63 {offsets = [2, 128], sizes = [46, 64], strides = [1, 1]} : vector<48x192xf32> to vector<46x64xf32>
    %69 = arith.addf %67, %68 : vector<46x64xf32>
    %c8 = arith.constant 8 : index
    %c0_56 = arith.constant 0 : index
    %70 = vector.load %arg12[%c8, %c0_56] : memref<64x64xbf16, #tpu.memory_space<vmem>>, vector<48x64xbf16>
    %c64 = arith.constant 64 : index
    %c0_57 = arith.constant 0 : index
    %71 = vector.load %arg5[%c64, %c0_57] : memref<192x192xbf16, #tpu.memory_space<vmem>>, vector<64x192xbf16>
    %cst_58 = arith.constant dense<0.000000e+00> : vector<48x192xf32>
    %72 = tpu.matmul %70, %71, %cst_58 {dimension_numbers = #tpu.dot_dimension_numbers<[1], [0], [0], [1], [0, 0, 1, 1], [], []>} : vector<48x64xbf16>, vector<64x192xbf16>, vector<48x192xf32> -> vector<48x192xf32>
    %73 = vector.extract_strided_slice %72 {offsets = [0, 0], sizes = [46, 64], strides = [1, 1]} : vector<48x192xf32> to vector<46x64xf32>
    %74 = arith.addf %69, %73 : vector<46x64xf32>
    %75 = vector.extract_strided_slice %72 {offsets = [1, 64], sizes = [46, 64], strides = [1, 1]} : vector<48x192xf32> to vector<46x64xf32>
    %76 = arith.addf %74, %75 : vector<46x64xf32>
    %77 = vector.extract_strided_slice %72 {offsets = [2, 128], sizes = [46, 64], strides = [1, 1]} : vector<48x192xf32> to vector<46x64xf32>
    %78 = arith.addf %76, %77 : vector<46x64xf32>
    %c16 = arith.constant 16 : index
    %c0_59 = arith.constant 0 : index
    %79 = vector.load %arg12[%c16, %c0_59] : memref<64x64xbf16, #tpu.memory_space<vmem>>, vector<48x64xbf16>
    %c128 = arith.constant 128 : index
    %c0_60 = arith.constant 0 : index
    %80 = vector.load %arg5[%c128, %c0_60] : memref<192x192xbf16, #tpu.memory_space<vmem>>, vector<64x192xbf16>
    %cst_61 = arith.constant dense<0.000000e+00> : vector<48x192xf32>
    %81 = tpu.matmul %79, %80, %cst_61 {dimension_numbers = #tpu.dot_dimension_numbers<[1], [0], [0], [1], [0, 0, 1, 1], [], []>} : vector<48x64xbf16>, vector<64x192xbf16>, vector<48x192xf32> -> vector<48x192xf32>
    %82 = vector.extract_strided_slice %81 {offsets = [0, 0], sizes = [46, 64], strides = [1, 1]} : vector<48x192xf32> to vector<46x64xf32>
    %83 = arith.addf %78, %82 : vector<46x64xf32>
    %84 = vector.extract_strided_slice %81 {offsets = [1, 64], sizes = [46, 64], strides = [1, 1]} : vector<48x192xf32> to vector<46x64xf32>
    %85 = arith.addf %83, %84 : vector<46x64xf32>
    %86 = vector.extract_strided_slice %81 {offsets = [2, 128], sizes = [46, 64], strides = [1, 1]} : vector<48x192xf32> to vector<46x64xf32>
    %87 = arith.addf %85, %86 : vector<46x64xf32>
    %cst_62 = arith.constant 0.000000e+00 : f32
    %88 = vector.broadcast %cst_62 : f32 to vector<46x64xf32>
    %89 = arith.maximumf %87, %88 : vector<46x64xf32>
    %90 = vector.broadcast %57 : vector<46x1xf32> to vector<46x64xf32>
    %91 = arith.mulf %89, %90 : vector<46x64xf32>
    %92 = tpu.concatenate %58, %91, %59 in 0 : vector<9x64xf32>, vector<46x64xf32>, vector<9x64xf32> -> vector<64x64xf32>
    %93 = arith.truncf %92 : vector<64x64xf32> to vector<64x64xbf16>
    %c0_63 = arith.constant 0 : index
    %c0_64 = arith.constant 0 : index
    %94 = vector.load %arg13[%c0_63, %c0_64] : memref<64x64xbf16, #tpu.memory_space<vmem>>, vector<64x64xbf16>
    tpu.vector_store %arg13[%c0_63, %c0_64], %93 {strides = array<i32>} : memref<64x64xbf16, #tpu.memory_space<vmem>>, vector<64x64xbf16>,
    %cst_65 = arith.constant 0.000000e+00 : f32
    %95 = vector.broadcast %cst_65 : f32 to vector<46x64xf32>
    %c0_66 = arith.constant 0 : index
    %c0_67 = arith.constant 0 : index
    %96 = vector.load %arg13[%c0_66, %c0_67] : memref<64x64xbf16, #tpu.memory_space<vmem>>, vector<48x64xbf16>
    %c0_68 = arith.constant 0 : index
    %c0_69 = arith.constant 0 : index
    %97 = vector.load %arg6[%c0_68, %c0_69] : memref<192x192xbf16, #tpu.memory_space<vmem>>, vector<64x192xbf16>
    %cst_70 = arith.constant dense<0.000000e+00> : vector<48x192xf32>
    %98 = tpu.matmul %96, %97, %cst_70 {dimension_numbers = #tpu.dot_dimension_numbers<[1], [0], [0], [1], [0, 0, 1, 1], [], []>} : vector<48x64xbf16>, vector<64x192xbf16>, vector<48x192xf32> -> vector<48x192xf32>
    %99 = vector.extract_strided_slice %98 {offsets = [0, 0], sizes = [46, 64], strides = [1, 1]} : vector<48x192xf32> to vector<46x64xf32>
    %100 = arith.addf %95, %99 : vector<46x64xf32>
    %101 = vector.extract_strided_slice %98 {offsets = [1, 64], sizes = [46, 64], strides = [1, 1]} : vector<48x192xf32> to vector<46x64xf32>
    %102 = arith.addf %100, %101 : vector<46x64xf32>
    %103 = vector.extract_strided_slice %98 {offsets = [2, 128], sizes = [46, 64], strides = [1, 1]} : vector<48x192xf32> to vector<46x64xf32>
    %104 = arith.addf %102, %103 : vector<46x64xf32>
    %c8_71 = arith.constant 8 : index
    %c0_72 = arith.constant 0 : index
    %105 = vector.load %arg13[%c8_71, %c0_72] : memref<64x64xbf16, #tpu.memory_space<vmem>>, vector<48x64xbf16>
    %c64_73 = arith.constant 64 : index
    %c0_74 = arith.constant 0 : index
    %106 = vector.load %arg6[%c64_73, %c0_74] : memref<192x192xbf16, #tpu.memory_space<vmem>>, vector<64x192xbf16>
    %cst_75 = arith.constant dense<0.000000e+00> : vector<48x192xf32>
    %107 = tpu.matmul %105, %106, %cst_75 {dimension_numbers = #tpu.dot_dimension_numbers<[1], [0], [0], [1], [0, 0, 1, 1], [], []>} : vector<48x64xbf16>, vector<64x192xbf16>, vector<48x192xf32> -> vector<48x192xf32>
    %108 = vector.extract_strided_slice %107 {offsets = [0, 0], sizes = [46, 64], strides = [1, 1]} : vector<48x192xf32> to vector<46x64xf32>
    %109 = arith.addf %104, %108 : vector<46x64xf32>
    %110 = vector.extract_strided_slice %107 {offsets = [1, 64], sizes = [46, 64], strides = [1, 1]} : vector<48x192xf32> to vector<46x64xf32>
    %111 = arith.addf %109, %110 : vector<46x64xf32>
    %112 = vector.extract_strided_slice %107 {offsets = [2, 128], sizes = [46, 64], strides = [1, 1]} : vector<48x192xf32> to vector<46x64xf32>
    %113 = arith.addf %111, %112 : vector<46x64xf32>
    %c16_76 = arith.constant 16 : index
    %c0_77 = arith.constant 0 : index
    %114 = vector.load %arg13[%c16_76, %c0_77] : memref<64x64xbf16, #tpu.memory_space<vmem>>, vector<48x64xbf16>
    %c128_78 = arith.constant 128 : index
    %c0_79 = arith.constant 0 : index
    %115 = vector.load %arg6[%c128_78, %c0_79] : memref<192x192xbf16, #tpu.memory_space<vmem>>, vector<64x192xbf16>
    %cst_80 = arith.constant dense<0.000000e+00> : vector<48x192xf32>
    %116 = tpu.matmul %114, %115, %cst_80 {dimension_numbers = #tpu.dot_dimension_numbers<[1], [0], [0], [1], [0, 0, 1, 1], [], []>} : vector<48x64xbf16>, vector<64x192xbf16>, vector<48x192xf32> -> vector<48x192xf32>
    %117 = vector.extract_strided_slice %116 {offsets = [0, 0], sizes = [46, 64], strides = [1, 1]} : vector<48x192xf32> to vector<46x64xf32>
    %118 = arith.addf %113, %117 : vector<46x64xf32>
    %119 = vector.extract_strided_slice %116 {offsets = [1, 64], sizes = [46, 64], strides = [1, 1]} : vector<48x192xf32> to vector<46x64xf32>
    %120 = arith.addf %118, %119 : vector<46x64xf32>
    %121 = vector.extract_strided_slice %116 {offsets = [2, 128], sizes = [46, 64], strides = [1, 1]} : vector<48x192xf32> to vector<46x64xf32>
    %122 = arith.addf %120, %121 : vector<46x64xf32>
    %c9 = arith.constant 9 : index
    %c0_81 = arith.constant 0 : index
    %123 = vector.load %arg12[%c9, %c0_81] : memref<64x64xbf16, #tpu.memory_space<vmem>>, vector<46x64xbf16>
    %124 = arith.extf %123 : vector<46x64xbf16> to vector<46x64xf32>
    %c0_82 = arith.constant 0 : index
    %c0_83 = arith.constant 0 : index
    %125 = vector.load %arg7[%c0_82, %c0_83] : memref<1x64xf32, #tpu.memory_space<vmem>>, vector<1x64xf32>
    %126 = vector.broadcast %125 : vector<1x64xf32> to vector<46x64xf32>
    %127 = arith.addf %122, %126 : vector<46x64xf32>
    %128 = arith.addf %127, %124 : vector<46x64xf32>
    %cst_84 = arith.constant 0.000000e+00 : f32
    %129 = vector.broadcast %cst_84 : f32 to vector<46x64xf32>
    %130 = arith.maximumf %128, %129 : vector<46x64xf32>
    %131 = vector.broadcast %57 : vector<46x1xf32> to vector<46x64xf32>
    %132 = arith.mulf %130, %131 : vector<46x64xf32>
    %133 = tpu.concatenate %58, %132, %59 in 0 : vector<9x64xf32>, vector<46x64xf32>, vector<9x64xf32> -> vector<64x64xf32>
    %134 = arith.truncf %133 : vector<64x64xf32> to vector<64x64xbf16>
    %c0_85 = arith.constant 0 : index
    %c0_86 = arith.constant 0 : index
    %135 = vector.load %arg10[%c0_85, %c0_86] : memref<64x64xbf16, #tpu.memory_space<vmem>>, vector<64x64xbf16>
    tpu.vector_store %arg10[%c0_85, %c0_86], %134 {strides = array<i32>} : memref<64x64xbf16, #tpu.memory_space<vmem>>, vector<64x64xbf16>,
    %cst_87 = arith.constant dense<0.000000e+00> : vector<64xf32>
    %136 = vector.multi_reduction <add>, %132, %cst_87 [0] : vector<46x64xf32> to vector<64xf32>
    %137 = vector.shape_cast %136 : vector<64xf32> to vector<1x64xf32>
    %cst_88 = arith.constant 4.000000e-02 : f32
    %138 = vector.broadcast %cst_88 : f32 to vector<1x64xf32>
    %139 = arith.mulf %137, %138 : vector<1x64xf32>
    %c0_89 = arith.constant 0 : index
    %c0_90 = arith.constant 0 : index
    %140 = vector.load %arg8[%c0_89, %c0_90] : memref<64x128xf32, #tpu.memory_space<vmem>>, vector<64x128xf32>
    %cst_91 = arith.constant dense<0.000000e+00> : vector<1x128xf32>
    %141 = tpu.matmul %139, %140, %cst_91 {dimension_numbers = #tpu.dot_dimension_numbers<[1], [0], [0], [1], [0, 0, 1, 1], [], []>} : vector<1x64xf32>, vector<64x128xf32>, vector<1x128xf32> -> vector<1x128xf32>
    %c0_92 = arith.constant 0 : index
    %c0_93 = arith.constant 0 : index
    %142 = vector.load %arg9[%c0_92, %c0_93] : memref<1x128xf32, #tpu.memory_space<vmem>>, vector<1x128xf32>
    %143 = arith.addf %141, %142 : vector<1x128xf32>
    %144 = vector.shape_cast %143 : vector<1x128xf32> to vector<1x1x128xf32>
    %c0_94 = arith.constant 0 : index
    %c0_95 = arith.constant 0 : index
    %c0_96 = arith.constant 0 : index
    %145 = vector.load %arg11[%c0_94, %c0_95, %c0_96] : memref<1x1x128xf32, #tpu.memory_space<vmem>>, vector<1x1x128xf32>
    tpu.vector_store %arg11[%c0_94, %c0_95, %c0_96], %144 {strides = array<i32>} : memref<1x1x128xf32, #tpu.memory_space<vmem>>, vector<1x1x128xf32>,
    return
  }
  func.func @transform_0(%arg0: i32) -> (i32, i32, i32, i32) {
    %c0_i32 = arith.constant 0 : i32
    %c0_i32_0 = arith.constant 0 : i32
    %c0_i32_1 = arith.constant 0 : i32
    %c0_i32_2 = arith.constant 0 : i32
    return %arg0, %c0_i32, %c0_i32_0, %c0_i32_1 : i32, i32, i32, i32
  }
  func.func @transform_1(%arg0: i32) -> (i32, i32, i32, i32) {
    %c0_i32 = arith.constant 0 : i32
    %c0_i32_0 = arith.constant 0 : i32
    %c0_i32_1 = arith.constant 0 : i32
    %c0_i32_2 = arith.constant 0 : i32
    return %arg0, %c0_i32, %c0_i32_0, %c0_i32_1 : i32, i32, i32, i32
  }
  func.func @transform_2(%arg0: i32) -> (i32, i32, i32, i32) {
    %c0_i32 = arith.constant 0 : i32
    %c0_i32_0 = arith.constant 0 : i32
    %c0_i32_1 = arith.constant 0 : i32
    %c0_i32_2 = arith.constant 0 : i32
    return %arg0, %c0_i32, %c0_i32_0, %c0_i32_1 : i32, i32, i32, i32
  }
  func.func @transform_3(%arg0: i32) -> (i32, i32, i32, i32) {
    %c0_i32 = arith.constant 0 : i32
    %c0_i32_0 = arith.constant 0 : i32
    %c0_i32_1 = arith.constant 0 : i32
    %c0_i32_2 = arith.constant 0 : i32
    return %arg0, %c0_i32, %c0_i32_0, %c0_i32_1 : i32, i32, i32, i32
  }
  func.func @transform_4(%arg0: i32) -> (i32, i32) {
    %c0_i32 = arith.constant 0 : i32
    %c0_i32_0 = arith.constant 0 : i32
    %c0_i32_1 = arith.constant 0 : i32
    return %c0_i32, %c0_i32_0 : i32, i32
  }
  func.func @transform_5(%arg0: i32) -> (i32, i32) {
    %c0_i32 = arith.constant 0 : i32
    %c0_i32_0 = arith.constant 0 : i32
    %c0_i32_1 = arith.constant 0 : i32
    return %c0_i32, %c0_i32_0 : i32, i32
  }
  func.func @transform_6(%arg0: i32) -> (i32, i32) {
    %c0_i32 = arith.constant 0 : i32
    %c0_i32_0 = arith.constant 0 : i32
    %c0_i32_1 = arith.constant 0 : i32
    return %c0_i32, %c0_i32_0 : i32, i32
  }
  func.func @transform_7(%arg0: i32) -> (i32, i32) {
    %c0_i32 = arith.constant 0 : i32
    %c0_i32_0 = arith.constant 0 : i32
    %c0_i32_1 = arith.constant 0 : i32
    return %c0_i32, %c0_i32_0 : i32, i32
  }
  func.func @transform_8(%arg0: i32) -> (i32, i32) {
    %c0_i32 = arith.constant 0 : i32
    %c0_i32_0 = arith.constant 0 : i32
    %c0_i32_1 = arith.constant 0 : i32
    return %c0_i32, %c0_i32_0 : i32, i32
  }
  func.func @transform_9(%arg0: i32) -> (i32, i32) {
    %c0_i32 = arith.constant 0 : i32
    %c0_i32_0 = arith.constant 0 : i32
    return %arg0, %c0_i32 : i32, i32
  }
  func.func @transform_10(%arg0: i32) -> (i32, i32, i32) {
    %c0_i32 = arith.constant 0 : i32
    %c0_i32_0 = arith.constant 0 : i32
    %c0_i32_1 = arith.constant 0 : i32
    return %arg0, %c0_i32, %c0_i32_0 : i32, i32, i32
  }
}

</mosaic_0001>

<llo_original>
// kernel: resnet18_client_forward.2
$region0: #{resnet18_client_forward.2}
  #allocation0 [shape = 'u32[]', space=smem, size = 0x4, offset = 0x4, fixed_abs, tag = 'smem constant byte address 0x4 - core index']
  #allocation1 [shape = 'u32[144,128]{1,0:T(1,128)}', space=vmem, size = 0x12000, scoped, tag = 'internal scratch']
  %s0 = inlined_call_operand.vmem [shape: bf16[224,32], index: 0, kind: input, shape index: {}]
  %s1 = inlined_call_operand.vmem [shape: bf16[32,64], index: 1, kind: input, shape index: {}]
  %s2 = inlined_call_operand.vmem [shape: bf16[224,64], index: 2, kind: output, shape index: {}]
  %s3 = sld [smem:[#allocation0]]
  $region41: #{resnet18_client_forward.2} parent=0
    _
  %s5 = ssub.s32 1, %s3
  %s6 = scalar_select 0, %s5, %s3
  loop: start=0, step=1, limit=4
  $region2: #{resnet18_client_forward.2} parent=0 // loop_pre_header
    _
  $region3: #{resnet18_client_forward.2} parent=0 // loop_header
    %s8 = sphi 0, %s12
    %p9 = scmp.ge.s32.totalorder %s8, 4
    %s18 = sphi 0, %s20
    %s21 = sphi 0, %s18
    %s22 = sphi 0, %s21
    %s38 = sphi 0, %s22
    %s42 = sphi 0, %s42
    %s44 = sphi 0, %s42
    %s45 = sphi 0, %s44
    %s59 = sphi 0, %s45
    %s65 = sphi 0, %s67
    %s68 = sphi 0, %s65
    %s69 = sphi 0, %s68
    %s85 = sphi 0, %s69
  $region4: #{resnet18_client_forward.2} parent=0 // loop_header_branch
    %11 = sbr.rel (%p9) target = $region8
  $region5: #{resnet18_client_forward.2} parent=0 // loop_body
    %s13 = ssub.s32 %s8, 1
    %s14 = ssub.s32 %s8, 2
    %s15 = sadd.s32 %s8, 1
    %s16 = ssub.s32 %s8, %s15
    %p17 = scmp.eq.s32.totalorder %s16, 0
    %s19 = sadd.s32 %s18, 1
    %s20 = scalar_select %p17, %s18, %s19
    %p23 = pneg %p17
    %p24 = scmp.eq.s32.totalorder %s8, 1
    %p25 = por %p23, %p24
    %p26 = scmp.ne.s32.totalorder %s18, %s21
    %p27 = scmp.eq.s32.totalorder %s8, 0
    %p28 = por %p26, %p27
    %p29 = scmp.ne.s32.totalorder %s18, %s21
    %p30 = scmp.eq.s32.totalorder %s13, 1
    %p31 = por %p29, %p30
    %p32 = scmp.ne.s32.totalorder %s21, %s22
    %p33 = scmp.eq.s32.totalorder %s13, 0
    %p34 = por %p32, %p33
    %p35 = scmp.ne.s32.totalorder %s21, %s22
    %p36 = scmp.eq.s32.totalorder %s14, 1
    %p37 = por %p35, %p36
    %p39 = scmp.ne.s32.totalorder %s22, %s38
    %p40 = scmp.eq.s32.totalorder %s14, 0
    %p41 = por %p39, %p40
    %s43 = sadd.s32 %s42, 1
    %p46 = scmp.eq.s32.totalorder %s8, 1
    %p47 = scmp.ne.s32.totalorder %s42, %s44
    %p48 = scmp.eq.s32.totalorder %s8, 0
    %p49 = por %p47, %p48
    %p50 = scmp.ne.s32.totalorder %s42, %s44
    %p51 = scmp.eq.s32.totalorder %s13, 1
    %p52 = por %p50, %p51
    %p53 = scmp.ne.s32.totalorder %s44, %s45
    %p54 = scmp.eq.s32.totalorder %s13, 0
    %p55 = por %p53, %p54
    %p56 = scmp.ne.s32.totalorder %s44, %s45
    %p57 = scmp.eq.s32.totalorder %s14, 1
    %p58 = por %p56, %p57
    %p60 = scmp.ne.s32.totalorder %s45, %s59
    %p61 = scmp.eq.s32.totalorder %s14, 0
    %p62 = por %p60, %p61
    %s63 = ssub.s32 %s8, %s15
    %p64 = scmp.eq.s32.totalorder %s63, 0
    %s66 = sadd.s32 %s65, 1
    %s67 = scalar_select %p64, %s65, %s66
    %p70 = pneg %p64
    %p71 = scmp.eq.s32.totalorder %s8, 1
    %p72 = por %p70, %p71
    %p73 = scmp.ne.s32.totalorder %s65, %s68
    %p74 = scmp.eq.s32.totalorder %s8, 0
    %p75 = por %p73, %p74
    %p76 = scmp.ne.s32.totalorder %s65, %s68
    %p77 = scmp.eq.s32.totalorder %s13, 1
    %p78 = por %p76, %p77
    %p79 = scmp.ne.s32.totalorder %s68, %s69
    %p80 = scmp.eq.s32.totalorder %s13, 0
    %p81 = por %p79, %p80
    %p82 = scmp.ne.s32.totalorder %s68, %s69
    %p83 = scmp.eq.s32.totalorder %s14, 1
    %p84 = por %p82, %p83
    %p86 = scmp.ne.s32.totalorder %s69, %s85
    %p87 = scmp.eq.s32.totalorder %s14, 0
    %p88 = por %p86, %p87
    %p89 = scmp.le.s32.totalorder 1, %s8
    %p90 = scmp.lt.s32.totalorder %s8, 3
    %p91 = pnand %p89, %p90
    %p92 = pneg %p91
    // Predicated region
    $region9: #{resnet18_client_forward.2} parent=5 // pred_check
      _
    $region10: #{resnet18_client_forward.2} parent=5 // pred_check_branch
      %94 = sbr.rel (%p91) target = $region12
    $region11: #{resnet18_client_forward.2} parent=5 // pred_region
      %s95 = ssub.s32 %s8, 1
      // Predicated region
      $region13: #{resnet18_client_forward.2} parent=11 // pred_check
        %p96 = pneg %p55
      $region14: #{resnet18_client_forward.2} parent=11 // pred_check_branch
        %98 = sbr.rel (%p96) target = $region16
      $region15: #{resnet18_client_forward.2} parent=11 // pred_region
        _
      $region16: #{resnet18_client_forward.2} parent=11 // pred_fallthru
        _
    $region12: #{resnet18_client_forward.2} parent=5 // pred_fallthru
      _
    %p99 = scmp.lt.s32.totalorder %s8, 2
    // Predicated region
    $region17: #{resnet18_client_forward.2} parent=5 // pred_check
      %p100 = pneg %p99
    $region18: #{resnet18_client_forward.2} parent=5 // pred_check_branch
      %102 = sbr.rel (%p100) target = $region20
    $region19: #{resnet18_client_forward.2} parent=5 // pred_region
      // Predicated region
      $region21: #{resnet18_client_forward.2} parent=19 // pred_check
        %p103 = pneg %p28
      $region22: #{resnet18_client_forward.2} parent=19 // pred_check_branch
        %105 = sbr.rel (%p103) target = $region24
      $region23: #{resnet18_client_forward.2} parent=19 // pred_region
        %s106 = smul.u32 14, %s8
        %p107 = scmp.lt.s32.totalorder %s106, 27
        %s108 = scalar_select %p107, %s106, 27
        %s109 = smul.addr %s108, 4
        %s110 = scalar_lea.vmem %s0, %s109
        %s111 = smul.u32 14, %s8
      $region24: #{resnet18_client_forward.2} parent=19 // pred_fallthru
        _
    $region20: #{resnet18_client_forward.2} parent=5 // pred_fallthru
      _
    %p112 = scmp.le.s32.totalorder 1, %s8
    %p113 = scmp.lt.s32.totalorder %s8, 3
    %p114 = pnand %p112, %p113
    %p115 = pneg %p114
    // Predicated region
    $region25: #{resnet18_client_forward.2} parent=5 // pred_check
      _
    $region26: #{resnet18_client_forward.2} parent=5 // pred_check_branch
      %117 = sbr.rel (%p114) target = $region28
    $region27: #{resnet18_client_forward.2} parent=5 // pred_region
      %s118 = ssub.s32 %s8, 1
      %s119 = smul.u32 14, %s13
      %p120 = scmp.lt.s32.totalorder %s119, 27
      %s121 = scalar_select %p120, %s119, 27
      %s122 = smul.addr %s121, 4
      %s123 = scalar_lea.vmem %s0, %s122
      %p124 = pneg %p34
      %p125 = pneg %p31
      %p126 = pneg %p55
      %p127 = pneg %p52
      %p128 = pneg %p81
      %p129 = pneg %p78
      %s130 = smul.u32 14, %s13
      %p131 = scmp.lt.s32.totalorder %s130, 27
      %s132 = scalar_select %p131, %s130, 27
      %s133 = smul.addr %s132, 4
      %s134 = scalar_lea.vmem %s2, %s133
      %s135 = smul.u32 14, %s13
      %p136 = scmp.lt.s32.totalorder %s135, 27
      %s137 = scalar_select %p136, %s135, 27
      %s138 = smul.addr %s137, 4
      %s139 = scalar_lea.vmem %s0, %s138
      %s140 = smul.u32 14, %s13
      %s141 = smul.u32 14, %s13
      %p142 = scmp.lt.s32.totalorder %s141, 27
      %s143 = scalar_select %p142, %s141, 27
      %s144 = smul.addr %s143, 4
      %s145 = scalar_lea.vmem %s2, %s144
      %s146 = smul.u32 14, %s13
      %v148 = vld [vmem:[%s139] sm:$0xf]
      %v149 = vld [vmem:[%s139 + $0x4] sm:$0xf]
      %v150 = vld [vmem:[%s139 + $0x8] sm:$0xf]
      %v151 = vld [vmem:[%s139 + $0xc] sm:$0xf]
      %v152 = vld [vmem:[%s139 + $0x10] sm:$0xf]
      %v153 = vld [vmem:[%s139 + $0x14] sm:$0xf]
      %v154 = vld [vmem:[%s139 + $0x18] sm:$0xf]
      %v155 = vld [vmem:[%s139 + $0x1c] sm:$0xf]
      %v156 = vld [vmem:[%s139 + $0x20] sm:$0xf]
      %v157 = vld [vmem:[%s139 + $0x24] sm:$0xf]
      %v158 = vld [vmem:[%s139 + $0x28] sm:$0xf]
      %v159 = vld [vmem:[%s139 + $0x2c] sm:$0xf]
      %v160 = vld [vmem:[%s139 + $0x30] sm:$0xf]
      %v161 = vld [vmem:[%s139 + $0x34] sm:$0xf]
      %v162 = vld [vmem:[%s1] sm:$0xf]
      %v163 = vld [vmem:[%s1 + $0x4] sm:$0xf]
      %v164 = vld [vmem:[%s1 + $0x8] sm:$0xf]
      %v165 = vld [vmem:[%s1 + $0xc] sm:$0xf]
      %v180 = vunpack.c.l.b16 %v148
      %v181 = vunpack.c.l.b16 %v149
      %v182 = vunpack.c.l.b16 %v150
      %v183 = vunpack.c.l.b16 %v151
      %v184 = vunpack.c.l.b16 %v152
      %v185 = vunpack.c.l.b16 %v153
      %v186 = vunpack.c.l.b16 %v154
      %v187 = vunpack.c.l.b16 %v155
      %v188 = vunpack.c.l.b16 %v156
      %v189 = vunpack.c.l.b16 %v157
      %v190 = vunpack.c.l.b16 %v158
      %v191 = vunpack.c.l.b16 %v159
      %v192 = vunpack.c.l.b16 %v160
      %v193 = vunpack.c.l.b16 %v161
      %v194 = vpack.c.b16 %v181, %v180
      %v195 = vpack.c.b16 %v183, %v182
      %v196 = vpack.c.b16 %v185, %v184
      %v197 = vpack.c.b16 %v187, %v186
      %v198 = vpack.c.b16 %v189, %v188
      %v199 = vpack.c.b16 %v191, %v190
      %v200 = vpack.c.b16 %v193, %v192
      %v205 = vunpack.c.l.b16 %v162
      %v206 = vunpack.c.l.b16 %v163
      %v207 = vunpack.c.l.b16 %v164
      %v208 = vunpack.c.l.b16 %v165
      %v209 = vpack.c.b16 %v206, %v205
      %v210 = vpack.c.b16 %v208, %v207
      %vm213 = vcmask 261120
      %v215 = vsel %vm213, %v194, 0
      %v218 = vsel %vm213, %v195, 0
      %v221 = vsel %vm213, %v196, 0
      %v224 = vsel %vm213, %v197, 0
      %v227 = vsel %vm213, %v198, 0
      %v230 = vsel %vm213, %v199, 0
      %v233 = vsel %vm213, %v200, 0
      %235 = vmatprep.subr.bf16.mxu0 0
      %236 = vmatpush1.bf16.msra.mxu0 0
      %237 = vmatprep.subr.bf16.mxu0 0
      %238 = vmatpush1.bf16.msra.mxu0 0
      %239 = vmatprep.subr.bf16.mxu0 0
      %240 = vmatpush1.bf16.msra.mxu0 0
      %241 = vmatprep.subr.bf16.mxu0 0
      %242 = vmatpush1.bf16.msra.mxu0 0
      %243 = vmatprep.subr.bf16.mxu0 0
      %244 = vmatpush1.bf16.msra.mxu0 0
      %245 = vmatprep.subr.bf16.mxu0 0
      %246 = vmatpush1.bf16.msra.mxu0 0
      %247 = vmatprep.subr.bf16.mxu0 0
      %248 = vmatpush1.bf16.msra.mxu0 %v210
      %249 = vmatprep.subr.bf16.mxu0 0
      %250 = vmatpush1.bf16.msra.mxu0 %v209
      %251 = vmatprep.subr.bf16.mxu0 0
      %252 = vmatpush2.bf16.msra.mxu0 0
      %253 = vmatprep.subr.bf16.mxu0 0
      %254 = vmatpush2.bf16.msra.mxu0 0
      %255 = vmatprep.subr.bf16.mxu0 0
      %256 = vmatpush2.bf16.msra.mxu0 0
      %257 = vmatprep.subr.bf16.mxu0 0
      %258 = vmatpush2.bf16.msra.mxu0 0
      %259 = vmatprep.subr.bf16.mxu0 0
      %260 = vmatpush2.bf16.msra.mxu0 0
      %261 = vmatprep.subr.bf16.mxu0 0
      %262 = vmatpush2.bf16.msra.mxu0 0
      %263 = vmatprep.subr.bf16.mxu0 0
      %264 = vmatpush2.bf16.msra.mxu0 0
      %265 = vmatprep.subr.bf16.mxu0 0
      %266 = vmatpush2.bf16.msra.mxu0 0
      %267 = vmatprep.mubr.bf16.mxu0 0
      %268 = vmatmul.mubr.bf16.gmra.mxu0 %v215
      %v269 = vpop.f32.mrf.mxu0
      %v270 = vadd.f32 0.0, %v269
      %v271 = vpop.f32.mrf.mxu0
      %v272 = vpop.f32.mrf.mxu0
      %v273 = vadd.f32 0.0, %v272
      %v274 = vpop.f32.mrf.mxu0
      %275 = vmatprep.mubr.bf16.mxu0 0
      %276 = vmatmul.mubr.bf16.gmra.mxu0 %v218
      %v277 = vpop.f32.mrf.mxu0
      %v278 = vadd.f32 0.0, %v277
      %v279 = vpop.f32.mrf.mxu0
      %v280 = vpop.f32.mrf.mxu0
      %v281 = vadd.f32 0.0, %v280
      %v282 = vpop.f32.mrf.mxu0
      %283 = vmatprep.mubr.bf16.mxu0 0
      %284 = vmatmul.mubr.bf16.gmra.mxu0 %v221
      %v285 = vpop.f32.mrf.mxu0
      %v286 = vadd.f32 0.0, %v285
      %v287 = vpop.f32.mrf.mxu0
      %v288 = vpop.f32.mrf.mxu0
      %v289 = vadd.f32 0.0, %v288
      %v290 = vpop.f32.mrf.mxu0
      %291 = vmatprep.mubr.bf16.mxu0 0
      %292 = vmatmul.mubr.bf16.gmra.mxu0 %v224
      %v293 = vpop.f32.mrf.mxu0
      %v294 = vadd.f32 0.0, %v293
      %v295 = vpop.f32.mrf.mxu0
      %v296 = vpop.f32.mrf.mxu0
      %v297 = vadd.f32 0.0, %v296
      %v298 = vpop.f32.mrf.mxu0
      %299 = vmatprep.mubr.bf16.mxu0 0
      %300 = vmatmul.mubr.bf16.gmra.mxu0 %v227
      %v301 = vpop.f32.mrf.mxu0
      %v302 = vadd.f32 0.0, %v301
      %v303 = vpop.f32.mrf.mxu0
      %v304 = vpop.f32.mrf.mxu0
      %v305 = vadd.f32 0.0, %v304
      %v306 = vpop.f32.mrf.mxu0
      %307 = vmatprep.mubr.bf16.mxu0 0
      %308 = vmatmul.mubr.bf16.gmra.mxu0 %v230
      %v309 = vpop.f32.mrf.mxu0
      %v310 = vadd.f32 0.0, %v309
      %v311 = vpop.f32.mrf.mxu0
      %v312 = vpop.f32.mrf.mxu0
      %v313 = vadd.f32 0.0, %v312
      %v314 = vpop.f32.mrf.mxu0
      %315 = vmatprep.mubr.bf16.mxu0 0
      %316 = vmatmul.mubr.bf16.gmra.mxu0 %v233
      %v317 = vpop.f32.mrf.mxu0
      %v318 = vadd.f32 0.0, %v317
      %v319 = vpop.f32.mrf.mxu0
      %v320 = vpop.f32.mrf.mxu0
      %v321 = vadd.f32 0.0, %v320
      %v322 = vpop.f32.mrf.mxu0
      %323 = vdwg.mxu0
      %v324 = vmax.f32 %v270, 0.0
      %v325 = vmax.f32 %v273, 0.0
      %v326 = vmax.f32 %v278, 0.0
      %v327 = vmax.f32 %v281, 0.0
      %v328 = vmax.f32 %v286, 0.0
      %v329 = vmax.f32 %v289, 0.0
      %v330 = vmax.f32 %v294, 0.0
      %v331 = vmax.f32 %v297, 0.0
      %v332 = vmax.f32 %v302, 0.0
      %v333 = vmax.f32 %v305, 0.0
      %v334 = vmax.f32 %v310, 0.0
      %v335 = vmax.f32 %v313, 0.0
      %v336 = vmax.f32 %v318, 0.0
      %v337 = vmax.f32 %v321, 0.0
      %v338 = vpack.c.bf16 %v325, %v324
      %v339 = vpack.c.bf16 %v327, %v326
      %v340 = vpack.c.bf16 %v329, %v328
      %v341 = vpack.c.bf16 %v331, %v330
      %v342 = vpack.c.bf16 %v333, %v332
      %v343 = vpack.c.bf16 %v335, %v334
      %v344 = vpack.c.bf16 %v337, %v336
      %v352 = vunpack.c.l.b16 %v338
      %v353 = vunpack.c.h.b16 %v338
      %v354 = vunpack.c.l.b16 %v339
      %v355 = vunpack.c.h.b16 %v339
      %v356 = vunpack.c.l.b16 %v340
      %v357 = vunpack.c.h.b16 %v340
      %v358 = vunpack.c.l.b16 %v341
      %v359 = vunpack.c.h.b16 %v341
      %v360 = vunpack.c.l.b16 %v342
      %v361 = vunpack.c.h.b16 %v342
      %v362 = vunpack.c.l.b16 %v343
      %v363 = vunpack.c.h.b16 %v343
      %v364 = vunpack.c.l.b16 %v344
      %v365 = vunpack.c.h.b16 %v344
      %v366 = vpack.c.b16 %v352, %v352
      %v367 = vpack.c.b16 %v353, %v353
      %v368 = vpack.c.b16 %v354, %v354
      %v369 = vpack.c.b16 %v355, %v355
      %v370 = vpack.c.b16 %v356, %v356
      %v371 = vpack.c.b16 %v357, %v357
      %v372 = vpack.c.b16 %v358, %v358
      %v373 = vpack.c.b16 %v359, %v359
      %v374 = vpack.c.b16 %v360, %v360
      %v375 = vpack.c.b16 %v361, %v361
      %v376 = vpack.c.b16 %v362, %v362
      %v377 = vpack.c.b16 %v363, %v363
      %v378 = vpack.c.b16 %v364, %v364
      %v379 = vpack.c.b16 %v365, %v365
      %vm394 = vcmask 519168
      %395 = vst.msk [vmem:[%s145] sm:$0xf] %vm394, %v366
      %396 = vst.msk [vmem:[%s145 + $0x4] sm:$0xf] %vm394, %v367
      %397 = vst.msk [vmem:[%s145 + $0x8] sm:$0xf] %vm394, %v368
      %398 = vst.msk [vmem:[%s145 + $0xc] sm:$0xf] %vm394, %v369
      %399 = vst.msk [vmem:[%s145 + $0x10] sm:$0xf] %vm394, %v370
      %400 = vst.msk [vmem:[%s145 + $0x14] sm:$0xf] %vm394, %v371
      %401 = vst.msk [vmem:[%s145 + $0x18] sm:$0xf] %vm394, %v372
      %402 = vst.msk [vmem:[%s145 + $0x1c] sm:$0xf] %vm394, %v373
      %403 = vst.msk [vmem:[%s145 + $0x20] sm:$0xf] %vm394, %v374
      %404 = vst.msk [vmem:[%s145 + $0x24] sm:$0xf] %vm394, %v375
      %405 = vst.msk [vmem:[%s145 + $0x28] sm:$0xf] %vm394, %v376
      %406 = vst.msk [vmem:[%s145 + $0x2c] sm:$0xf] %vm394, %v377
      %407 = vst.msk [vmem:[%s145 + $0x30] sm:$0xf] %vm394, %v378
      %408 = vst.msk [vmem:[%s145 + $0x34] sm:$0xf] %vm394, %v379
      %s409 = smul.u32 14, %s13
      %p410 = scmp.lt.s32.totalorder %s409, 27
      %s411 = scalar_select %p410, %s409, 27
      %s412 = smul.addr %s411, 4
      %s413 = scalar_lea.vmem %s2, %s412
      // Predicated region
      $region29: #{resnet18_client_forward.2} parent=27 // pred_check
        %p414 = pneg %p78
      $region30: #{resnet18_client_forward.2} parent=27 // pred_check_branch
        %416 = sbr.rel (%p414) target = $region32
      $region31: #{resnet18_client_forward.2} parent=27 // pred_region
        %s417 = smul.u32 14, %s13
      $region32: #{resnet18_client_forward.2} parent=27 // pred_fallthru
        _
    $region28: #{resnet18_client_forward.2} parent=5 // pred_fallthru
      _
    %p418 = scmp.le.s32.totalorder 2, %s8
    // Predicated region
    $region33: #{resnet18_client_forward.2} parent=5 // pred_check
      %p419 = pneg %p418
    $region34: #{resnet18_client_forward.2} parent=5 // pred_check_branch
      %421 = sbr.rel (%p419) target = $region36
    $region35: #{resnet18_client_forward.2} parent=5 // pred_region
      %s422 = ssub.s32 %s8, 2
      // Predicated region
      $region37: #{resnet18_client_forward.2} parent=35 // pred_check
        %p423 = pneg %p84
      $region38: #{resnet18_client_forward.2} parent=35 // pred_check_branch
        %425 = sbr.rel (%p423) target = $region40
      $region39: #{resnet18_client_forward.2} parent=35 // pred_region
        %s426 = smul.u32 14, %s14
        %p427 = scmp.lt.s32.totalorder %s426, 27
        %s428 = scalar_select %p427, %s426, 27
        %s429 = smul.addr %s428, 4
        %s430 = scalar_lea.vmem %s2, %s429
      $region40: #{resnet18_client_forward.2} parent=35 // pred_fallthru
        _
    $region36: #{resnet18_client_forward.2} parent=5 // pred_fallthru
      _
  $region6: #{resnet18_client_forward.2} parent=0 // loop_footer
    %s12 = sadd.s32 1, %s8
  $region7: #{resnet18_client_forward.2} parent=0 // loop_footer_branch
    %7 = sbr.rel target = $region3
  $region8: #{resnet18_client_forward.2} parent=0 // loop_exit
    _

// kernel: resnet18_client_forward.3
$region0: #{resnet18_client_forward.3}
  #allocation0 [shape = 'u32[]', space=smem, size = 0x4, offset = 0x4, fixed_abs, tag = 'smem constant byte address 0x4 - core index']
  #allocation1 [shape = 'u32[144,128]{1,0:T(1,128)}', space=vmem, size = 0x12000, scoped, tag = 'internal scratch']
  #allocation2 [shape = 'bf16[64,64]{1,0:T(8,128)(2,1)}', space=vmem, size = 0x4000, scoped, tag = 'scratch operand']
  #allocation3 [shape = 'bf16[64,64]{1,0:T(8,128)(2,1)}', space=vmem, size = 0x4000, scoped, tag = 'scratch operand']
  %s0 = inlined_call_operand.vmem [shape: bf16[2,6,6,64], index: 0, kind: input, shape index: {}]
  %s1 = inlined_call_operand.vmem [shape: bf16[2,6,6,64], index: 1, kind: input, shape index: {}]
  %s2 = inlined_call_operand.vmem [shape: bf16[2,6,6,64], index: 2, kind: input, shape index: {}]
  %s3 = inlined_call_operand.vmem [shape: bf16[2,6,6,64], index: 3, kind: input, shape index: {}]
  %s4 = inlined_call_operand.vmem [shape: bf16[192,192], index: 4, kind: input, shape index: {}]
  %s5 = inlined_call_operand.vmem [shape: bf16[192,192], index: 5, kind: input, shape index: {}]
  %s6 = inlined_call_operand.vmem [shape: f32[1,64], index: 6, kind: input, shape index: {}]
  %s7 = inlined_call_operand.vmem [shape: f32[64,128], index: 7, kind: input, shape index: {}]
  %s8 = inlined_call_operand.vmem [shape: f32[1,128], index: 8, kind: input, shape index: {}]
  %s9 = inlined_call_operand.vmem [shape: bf16[128,64], index: 9, kind: output, shape index: {0}]
  %s10 = inlined_call_operand.hbm [shape: f32[2,1,128], index: 10, kind: output, shape index: {1}]
  %11 = xla_tuple %s9, %s10
  %s12 = sld [smem:[#allocation0]]
  $region77: #{resnet18_client_forward.3} parent=0
    _
  %s14 = ssub.s32 1, %s12
  %s15 = scalar_select 0, %s14, %s12
  $region1: #{resnet18_client_forward.3} parent=0
    #allocation4 [shape = 'u8[1024]{0}', space=vmem, size = 0x400, scoped, tag = 'output window, operand 1']
    #allocation5 [shape = 's32[2]{0}', space=sflag, size = 0x8, scoped, tag = 'scoped memory for resnet18_client_forward.3']
    %16 = vsyncpa [#allocation5], 0
    %s17 = scalar_lea.sflag [#allocation5], 1
    %18 = vsyncpa %s17, 0
    loop: start=0, step=1, limit=4
    $region2: #{resnet18_client_forward.3} parent=1 // loop_pre_header
      _
    $region3: #{resnet18_client_forward.3} parent=1 // loop_header
      %s20 = sphi 0, %s24
      %p21 = scmp.ge.s32.totalorder %s20, 4
      %s30 = sphi 0, %s32
      %s33 = sphi 0, %s30
      %s34 = sphi 0, %s33
      %s50 = sphi 0, %s34
      %s56 = sphi 0, %s58
      %s59 = sphi 0, %s56
      %s60 = sphi 0, %s59
      %s76 = sphi 0, %s60
      %s82 = sphi 0, %s84
      %s85 = sphi 0, %s82
      %s86 = sphi 0, %s85
      %s102 = sphi 0, %s86
      %s108 = sphi 0, %s110
      %s111 = sphi 0, %s108
      %s112 = sphi 0, %s111
      %s128 = sphi 0, %s112
      %s132 = sphi 0, %s132
      %s134 = sphi 0, %s132
      %s135 = sphi 0, %s134
      %s149 = sphi 0, %s135
      %s153 = sphi 0, %s153
      %s155 = sphi 0, %s153
      %s156 = sphi 0, %s155
      %s170 = sphi 0, %s156
      %s174 = sphi 0, %s174
      %s176 = sphi 0, %s174
      %s177 = sphi 0, %s176
      %s191 = sphi 0, %s177
      %s195 = sphi 0, %s195
      %s197 = sphi 0, %s195
      %s198 = sphi 0, %s197
      %s212 = sphi 0, %s198
      %s216 = sphi 0, %s216
      %s218 = sphi 0, %s216
      %s219 = sphi 0, %s218
      %s233 = sphi 0, %s219
      %s239 = sphi 0, %s241
      %s242 = sphi 0, %s239
      %s243 = sphi 0, %s242
      %s259 = sphi 0, %s243
      %s265 = sphi 0, %s267
      %s268 = sphi 0, %s265
      %s269 = sphi 0, %s268
      %s285 = sphi 0, %s269
    $region4: #{resnet18_client_forward.3} parent=1 // loop_header_branch
      %23 = sbr.rel (%p21) target = $region8
    $region5: #{resnet18_client_forward.3} parent=1 // loop_body
      %s25 = ssub.s32 %s20, 1
      %s26 = ssub.s32 %s20, 2
      %s27 = sadd.s32 %s20, 1
      %s28 = ssub.s32 %s20, %s27
      %p29 = scmp.eq.s32.totalorder %s28, 0
      %s31 = sadd.s32 %s30, 1
      %s32 = scalar_select %p29, %s30, %s31
      %p35 = pneg %p29
      %p36 = scmp.eq.s32.totalorder %s20, 1
      %p37 = por %p35, %p36
      %p38 = scmp.ne.s32.totalorder %s30, %s33
      %p39 = scmp.eq.s32.totalorder %s20, 0
      %p40 = por %p38, %p39
      %p41 = scmp.ne.s32.totalorder %s30, %s33
      %p42 = scmp.eq.s32.totalorder %s25, 1
      %p43 = por %p41, %p42
      %p44 = scmp.ne.s32.totalorder %s33, %s34
      %p45 = scmp.eq.s32.totalorder %s25, 0
      %p46 = por %p44, %p45
      %p47 = scmp.ne.s32.totalorder %s33, %s34
      %p48 = scmp.eq.s32.totalorder %s26, 1
      %p49 = por %p47, %p48
      %p51 = scmp.ne.s32.totalorder %s34, %s50
      %p52 = scmp.eq.s32.totalorder %s26, 0
      %p53 = por %p51, %p52
      %s54 = ssub.s32 %s20, %s27
      %p55 = scmp.eq.s32.totalorder %s54, 0
      %s57 = sadd.s32 %s56, 1
      %s58 = scalar_select %p55, %s56, %s57
      %p61 = pneg %p55
      %p62 = scmp.eq.s32.totalorder %s20, 1
      %p63 = por %p61, %p62
      %p64 = scmp.ne.s32.totalorder %s56, %s59
      %p65 = scmp.eq.s32.totalorder %s20, 0
      %p66 = por %p64, %p65
      %p67 = scmp.ne.s32.totalorder %s56, %s59
      %p68 = scmp.eq.s32.totalorder %s25, 1
      %p69 = por %p67, %p68
      %p70 = scmp.ne.s32.totalorder %s59, %s60
      %p71 = scmp.eq.s32.totalorder %s25, 0
      %p72 = por %p70, %p71
      %p73 = scmp.ne.s32.totalorder %s59, %s60
      %p74 = scmp.eq.s32.totalorder %s26, 1
      %p75 = por %p73, %p74
      %p77 = scmp.ne.s32.totalorder %s60, %s76
      %p78 = scmp.eq.s32.totalorder %s26, 0
      %p79 = por %p77, %p78
      %s80 = ssub.s32 %s20, %s27
      %p81 = scmp.eq.s32.totalorder %s80, 0
      %s83 = sadd.s32 %s82, 1
      %s84 = scalar_select %p81, %s82, %s83
      %p87 = pneg %p81
      %p88 = scmp.eq.s32.totalorder %s20, 1
      %p89 = por %p87, %p88
      %p90 = scmp.ne.s32.totalorder %s82, %s85
      %p91 = scmp.eq.s32.totalorder %s20, 0
      %p92 = por %p90, %p91
      %p93 = scmp.ne.s32.totalorder %s82, %s85
      %p94 = scmp.eq.s32.totalorder %s25, 1
      %p95 = por %p93, %p94
      %p96 = scmp.ne.s32.totalorder %s85, %s86
      %p97 = scmp.eq.s32.totalorder %s25, 0
      %p98 = por %p96, %p97
      %p99 = scmp.ne.s32.totalorder %s85, %s86
      %p100 = scmp.eq.s32.totalorder %s26, 1
      %p101 = por %p99, %p100
      %p103 = scmp.ne.s32.totalorder %s86, %s102
      %p104 = scmp.eq.s32.totalorder %s26, 0
      %p105 = por %p103, %p104
      %s106 = ssub.s32 %s20, %s27
      %p107 = scmp.eq.s32.totalorder %s106, 0
      %s109 = sadd.s32 %s108, 1
      %s110 = scalar_select %p107, %s108, %s109
      %p113 = pneg %p107
      %p114 = scmp.eq.s32.totalorder %s20, 1
      %p115 = por %p113, %p114
      %p116 = scmp.ne.s32.totalorder %s108, %s111
      %p117 = scmp.eq.s32.totalorder %s20, 0
      %p118 = por %p116, %p117
      %p119 = scmp.ne.s32.totalorder %s108, %s111
      %p120 = scmp.eq.s32.totalorder %s25, 1
      %p121 = por %p119, %p120
      %p122 = scmp.ne.s32.totalorder %s111, %s112
      %p123 = scmp.eq.s32.totalorder %s25, 0
      %p124 = por %p122, %p123
      %p125 = scmp.ne.s32.totalorder %s111, %s112
      %p126 = scmp.eq.s32.totalorder %s26, 1
      %p127 = por %p125, %p126
      %p129 = scmp.ne.s32.totalorder %s112, %s128
      %p130 = scmp.eq.s32.totalorder %s26, 0
      %p131 = por %p129, %p130
      %s133 = sadd.s32 %s132, 1
      %p136 = scmp.eq.s32.totalorder %s20, 1
      %p137 = scmp.ne.s32.totalorder %s132, %s134
      %p138 = scmp.eq.s32.totalorder %s20, 0
      %p139 = por %p137, %p138
      %p140 = scmp.ne.s32.totalorder %s132, %s134
      %p141 = scmp.eq.s32.totalorder %s25, 1
      %p142 = por %p140, %p141
      %p143 = scmp.ne.s32.totalorder %s134, %s135
      %p144 = scmp.eq.s32.totalorder %s25, 0
      %p145 = por %p143, %p144
      %p146 = scmp.ne.s32.totalorder %s134, %s135
      %p147 = scmp.eq.s32.totalorder %s26, 1
      %p148 = por %p146, %p147
      %p150 = scmp.ne.s32.totalorder %s135, %s149
      %p151 = scmp.eq.s32.totalorder %s26, 0
      %p152 = por %p150, %p151
      %s154 = sadd.s32 %s153, 1
      %p157 = scmp.eq.s32.totalorder %s20, 1
      %p158 = scmp.ne.s32.totalorder %s153, %s155
      %p159 = scmp.eq.s32.totalorder %s20, 0
      %p160 = por %p158, %p159
      %p161 = scmp.ne.s32.totalorder %s153, %s155
      %p162 = scmp.eq.s32.totalorder %s25, 1
      %p163 = por %p161, %p162
      %p164 = scmp.ne.s32.totalorder %s155, %s156
      %p165 = scmp.eq.s32.totalorder %s25, 0
      %p166 = por %p164, %p165
      %p167 = scmp.ne.s32.totalorder %s155, %s156
      %p168 = scmp.eq.s32.totalorder %s26, 1
      %p169 = por %p167, %p168
      %p171 = scmp.ne.s32.totalorder %s156, %s170
      %p172 = scmp.eq.s32.totalorder %s26, 0
      %p173 = por %p171, %p172
      %s175 = sadd.s32 %s174, 1
      %p178 = scmp.eq.s32.totalorder %s20, 1
      %p179 = scmp.ne.s32.totalorder %s174, %s176
      %p180 = scmp.eq.s32.totalorder %s20, 0
      %p181 = por %p179, %p180
      %p182 = scmp.ne.s32.totalorder %s174, %s176
      %p183 = scmp.eq.s32.totalorder %s25, 1
      %p184 = por %p182, %p183
      %p185 = scmp.ne.s32.totalorder %s176, %s177
      %p186 = scmp.eq.s32.totalorder %s25, 0
      %p187 = por %p185, %p186
      %p188 = scmp.ne.s32.totalorder %s176, %s177
      %p189 = scmp.eq.s32.totalorder %s26, 1
      %p190 = por %p188, %p189
      %p192 = scmp.ne.s32.totalorder %s177, %s191
      %p193 = scmp.eq.s32.totalorder %s26, 0
      %p194 = por %p192, %p193
      %s196 = sadd.s32 %s195, 1
      %p199 = scmp.eq.s32.totalorder %s20, 1
      %p200 = scmp.ne.s32.totalorder %s195, %s197
      %p201 = scmp.eq.s32.totalorder %s20, 0
      %p202 = por %p200, %p201
      %p203 = scmp.ne.s32.totalorder %s195, %s197
      %p204 = scmp.eq.s32.totalorder %s25, 1
      %p205 = por %p203, %p204
      %p206 = scmp.ne.s32.totalorder %s197, %s198
      %p207 = scmp.eq.s32.totalorder %s25, 0
      %p208 = por %p206, %p207
      %p209 = scmp.ne.s32.totalorder %s197, %s198
      %p210 = scmp.eq.s32.totalorder %s26, 1
      %p211 = por %p209, %p210
      %p213 = scmp.ne.s32.totalorder %s198, %s212
      %p214 = scmp.eq.s32.totalorder %s26, 0
      %p215 = por %p213, %p214
      %s217 = sadd.s32 %s216, 1
      %p220 = scmp.eq.s32.totalorder %s20, 1
      %p221 = scmp.ne.s32.totalorder %s216, %s218
      %p222 = scmp.eq.s32.totalorder %s20, 0
      %p223 = por %p221, %p222
      %p224 = scmp.ne.s32.totalorder %s216, %s218
      %p225 = scmp.eq.s32.totalorder %s25, 1
      %p226 = por %p224, %p225
      %p227 = scmp.ne.s32.totalorder %s218, %s219
      %p228 = scmp.eq.s32.totalorder %s25, 0
      %p229 = por %p227, %p228
      %p230 = scmp.ne.s32.totalorder %s218, %s219
      %p231 = scmp.eq.s32.totalorder %s26, 1
      %p232 = por %p230, %p231
      %p234 = scmp.ne.s32.totalorder %s219, %s233
      %p235 = scmp.eq.s32.totalorder %s26, 0
      %p236 = por %p234, %p235
      %s237 = ssub.s32 %s20, %s27
      %p238 = scmp.eq.s32.totalorder %s237, 0
      %s240 = sadd.s32 %s239, 1
      %s241 = scalar_select %p238, %s239, %s240
      %p244 = pneg %p238
      %p245 = scmp.eq.s32.totalorder %s20, 1
      %p246 = por %p244, %p245
      %p247 = scmp.ne.s32.totalorder %s239, %s242
      %p248 = scmp.eq.s32.totalorder %s20, 0
      %p249 = por %p247, %p248
      %p250 = scmp.ne.s32.totalorder %s239, %s242
      %p251 = scmp.eq.s32.totalorder %s25, 1
      %p252 = por %p250, %p251
      %p253 = scmp.ne.s32.totalorder %s242, %s243
      %p254 = scmp.eq.s32.totalorder %s25, 0
      %p255 = por %p253, %p254
      %p256 = scmp.ne.s32.totalorder %s242, %s243
      %p257 = scmp.eq.s32.totalorder %s26, 1
      %p258 = por %p256, %p257
      %p260 = scmp.ne.s32.totalorder %s243, %s259
      %p261 = scmp.eq.s32.totalorder %s26, 0
      %p262 = por %p260, %p261
      %s263 = ssub.s32 %s20, %s27
      %p264 = scmp.eq.s32.totalorder %s263, 0
      %s266 = sadd.s32 %s265, 1
      %s267 = scalar_select %p264, %s265, %s266
      %p270 = pneg %p264
      %p271 = scmp.eq.s32.totalorder %s20, 1
      %p272 = por %p270, %p271
      %p273 = scmp.ne.s32.totalorder %s265, %s268
      %p274 = scmp.eq.s32.totalorder %s20, 0
      %p275 = por %p273, %p274
      %p276 = scmp.ne.s32.totalorder %s265, %s268
      %p277 = scmp.eq.s32.totalorder %s25, 1
      %p278 = por %p276, %p277
      %p279 = scmp.ne.s32.totalorder %s268, %s269
      %p280 = scmp.eq.s32.totalorder %s25, 0
      %p281 = por %p279, %p280
      %p282 = scmp.ne.s32.totalorder %s268, %s269
      %p283 = scmp.eq.s32.totalorder %s26, 1
      %p284 = por %p282, %p283
      %p286 = scmp.ne.s32.totalorder %s269, %s285
      %p287 = scmp.eq.s32.totalorder %s26, 0
      %p288 = por %p286, %p287
      %p289 = scmp.le.s32.totalorder 1, %s20
      %p290 = scmp.lt.s32.totalorder %s20, 3
      %p291 = pnand %p289, %p290
      %p292 = pneg %p291
      // Predicated region
      $region9: #{resnet18_client_forward.3} parent=5 // pred_check
        _
      $region10: #{resnet18_client_forward.3} parent=5 // pred_check_branch
        %294 = sbr.rel (%p291) target = $region12
      $region11: #{resnet18_client_forward.3} parent=5 // pred_region
        %s295 = ssub.s32 %s20, 1
        // Predicated region
        $region13: #{resnet18_client_forward.3} parent=11 // pred_check
          %p296 = pneg %p145
        $region14: #{resnet18_client_forward.3} parent=11 // pred_check_branch
          %298 = sbr.rel (%p296) target = $region16
        $region15: #{resnet18_client_forward.3} parent=11 // pred_region
          _
        $region16: #{resnet18_client_forward.3} parent=11 // pred_fallthru
          _
        // Predicated region
        $region17: #{resnet18_client_forward.3} parent=11 // pred_check
          %p299 = pneg %p166
        $region18: #{resnet18_client_forward.3} parent=11 // pred_check_branch
          %301 = sbr.rel (%p299) target = $region20
        $region19: #{resnet18_client_forward.3} parent=11 // pred_region
          _
        $region20: #{resnet18_client_forward.3} parent=11 // pred_fallthru
          _
        // Predicated region
        $region21: #{resnet18_client_forward.3} parent=11 // pred_check
          %p302 = pneg %p187
        $region22: #{resnet18_client_forward.3} parent=11 // pred_check_branch
          %304 = sbr.rel (%p302) target = $region24
        $region23: #{resnet18_client_forward.3} parent=11 // pred_region
          _
        $region24: #{resnet18_client_forward.3} parent=11 // pred_fallthru
          _
        // Predicated region
        $region25: #{resnet18_client_forward.3} parent=11 // pred_check
          %p305 = pneg %p208
        $region26: #{resnet18_client_forward.3} parent=11 // pred_check_branch
          %307 = sbr.rel (%p305) target = $region28
        $region27: #{resnet18_client_forward.3} parent=11 // pred_region
          _
        $region28: #{resnet18_client_forward.3} parent=11 // pred_fallthru
          _
        // Predicated region
        $region29: #{resnet18_client_forward.3} parent=11 // pred_check
          %p308 = pneg %p229
        $region30: #{resnet18_client_forward.3} parent=11 // pred_check_branch
          %310 = sbr.rel (%p308) target = $region32
        $region31: #{resnet18_client_forward.3} parent=11 // pred_region
          _
        $region32: #{resnet18_client_forward.3} parent=11 // pred_fallthru
          _
      $region12: #{resnet18_client_forward.3} parent=5 // pred_fallthru
        _
      %p311 = scmp.lt.s32.totalorder %s20, 2
      // Predicated region
      $region33: #{resnet18_client_forward.3} parent=5 // pred_check
        %p312 = pneg %p311
      $region34: #{resnet18_client_forward.3} parent=5 // pred_check_branch
        %314 = sbr.rel (%p312) target = $region36
      $region35: #{resnet18_client_forward.3} parent=5 // pred_region
        // Predicated region
        $region37: #{resnet18_client_forward.3} parent=35 // pred_check
          %p315 = pneg %p40
        $region38: #{resnet18_client_forward.3} parent=35 // pred_check_branch
          %317 = sbr.rel (%p315) target = $region40
        $region39: #{resnet18_client_forward.3} parent=35 // pred_region
          %p318 = scmp.lt.s32.totalorder %s20, 1
          %s319 = scalar_select %p318, %s20, 1
          %s320 = smul.addr %s319, 6
          %s321 = smul.addr %s320, 4
          %s322 = scalar_lea.vmem %s0, %s321
        $region40: #{resnet18_client_forward.3} parent=35 // pred_fallthru
          _
        // Predicated region
        $region41: #{resnet18_client_forward.3} parent=35 // pred_check
          %p323 = pneg %p66
        $region42: #{resnet18_client_forward.3} parent=35 // pred_check_branch
          %325 = sbr.rel (%p323) target = $region44
        $region43: #{resnet18_client_forward.3} parent=35 // pred_region
          %p326 = scmp.lt.s32.totalorder %s20, 1
          %s327 = scalar_select %p326, %s20, 1
          %s328 = smul.addr %s327, 6
          %s329 = smul.addr %s328, 4
          %s330 = scalar_lea.vmem %s1, %s329
        $region44: #{resnet18_client_forward.3} parent=35 // pred_fallthru
          _
        // Predicated region
        $region45: #{resnet18_client_forward.3} parent=35 // pred_check
          %p331 = pneg %p92
        $region46: #{resnet18_client_forward.3} parent=35 // pred_check_branch
          %333 = sbr.rel (%p331) target = $region48
        $region47: #{resnet18_client_forward.3} parent=35 // pred_region
          %p334 = scmp.lt.s32.totalorder %s20, 1
          %s335 = scalar_select %p334, %s20, 1
          %s336 = smul.addr %s335, 6
          %s337 = smul.addr %s336, 4
          %s338 = scalar_lea.vmem %s2, %s337
        $region48: #{resnet18_client_forward.3} parent=35 // pred_fallthru
          _
        // Predicated region
        $region49: #{resnet18_client_forward.3} parent=35 // pred_check
          %p339 = pneg %p118
        $region50: #{resnet18_client_forward.3} parent=35 // pred_check_branch
          %341 = sbr.rel (%p339) target = $region52
        $region51: #{resnet18_client_forward.3} parent=35 // pred_region
          %p342 = scmp.lt.s32.totalorder %s20, 1
          %s343 = scalar_select %p342, %s20, 1
          %s344 = smul.addr %s343, 6
          %s345 = smul.addr %s344, 4
          %s346 = scalar_lea.vmem %s3, %s345
        $region52: #{resnet18_client_forward.3} parent=35 // pred_fallthru
          _
      $region36: #{resnet18_client_forward.3} parent=5 // pred_fallthru
        _
      %p347 = scmp.le.s32.totalorder 1, %s20
      %p348 = scmp.lt.s32.totalorder %s20, 3
      %p349 = pnand %p347, %p348
      %p350 = pneg %p349
      // Predicated region
      $region53: #{resnet18_client_forward.3} parent=5 // pred_check
        _
      $region54: #{resnet18_client_forward.3} parent=5 // pred_check_branch
        %352 = sbr.rel (%p349) target = $region56
      $region55: #{resnet18_client_forward.3} parent=5 // pred_region
        %s353 = ssub.s32 %s20, 1
        %p354 = scmp.lt.s32.totalorder %s25, 1
        %s355 = scalar_select %p354, %s25, 1
        %s356 = smul.addr %s355, 6
        %s357 = smul.addr %s356, 4
        %s358 = scalar_lea.vmem %s0, %s357
        %p359 = pneg %p46
        %p360 = pneg %p43
        %p361 = scmp.lt.s32.totalorder %s25, 1
        %s362 = scalar_select %p361, %s25, 1
        %s363 = smul.addr %s362, 6
        %s364 = smul.addr %s363, 4
        %s365 = scalar_lea.vmem %s1, %s364
        %p366 = pneg %p72
        %p367 = pneg %p69
        %p368 = scmp.lt.s32.totalorder %s25, 1
        %s369 = scalar_select %p368, %s25, 1
        %s370 = smul.addr %s369, 6
        %s371 = smul.addr %s370, 4
        %s372 = scalar_lea.vmem %s2, %s371
        %p373 = pneg %p98
        %p374 = pneg %p95
        %p375 = scmp.lt.s32.totalorder %s25, 1
        %s376 = scalar_select %p375, %s25, 1
        %s377 = smul.addr %s376, 6
        %s378 = smul.addr %s377, 4
        %s379 = scalar_lea.vmem %s3, %s378
        %p380 = pneg %p124
        %p381 = pneg %p121
        %p382 = pneg %p145
        %p383 = pneg %p142
        %p384 = pneg %p166
        %p385 = pneg %p163
        %p386 = pneg %p187
        %p387 = pneg %p184
        %p388 = pneg %p208
        %p389 = pneg %p205
        %p390 = pneg %p229
        %p391 = pneg %p226
        %p392 = pneg %p255
        %p393 = pneg %p252
        %s394 = smul.u32 8, %s25
        %p395 = scmp.lt.s32.totalorder %s394, 15
        %s396 = scalar_select %p395, %s394, 15
        %s397 = smul.addr %s396, 4
        %s398 = scalar_lea.vmem %s9, %s397
        %p399 = pneg %p281
        %p400 = pneg %p278
        %s401 = sand.u32 %s268, 1
        %s402 = scalar_lea.sflag [#allocation5], %s401
        %s403 = sand.u32 %s268, 1
        %s404 = scalar_lea.vmem [#allocation4], %s403
        %p405 = scmp.lt.s32.totalorder %s25, 1
        %s406 = scalar_select %p405, %s25, 1
        %s407 = smul.addr %s406, 6
        %s408 = smul.addr %s407, 4
        %s409 = scalar_lea.vmem %s0, %s408
        %p410 = scmp.lt.s32.totalorder %s25, 1
        %s411 = scalar_select %p410, %s25, 1
        %s412 = smul.addr %s411, 6
        %s413 = smul.addr %s412, 4
        %s414 = scalar_lea.vmem %s1, %s413
        %p415 = scmp.lt.s32.totalorder %s25, 1
        %s416 = scalar_select %p415, %s25, 1
        %s417 = smul.addr %s416, 6
        %s418 = smul.addr %s417, 4
        %s419 = scalar_lea.vmem %s2, %s418
        %p420 = scmp.lt.s32.totalorder %s25, 1
        %s421 = scalar_select %p420, %s25, 1
        %s422 = smul.addr %s421, 6
        %s423 = smul.addr %s422, 4
        %s424 = scalar_lea.vmem %s3, %s423
        %s425 = smul.u32 8, %s25
        %p426 = scmp.lt.s32.totalorder %s425, 15
        %s427 = scalar_select %p426, %s425, 15
        %s428 = smul.addr %s427, 4
        %s429 = scalar_lea.vmem %s9, %s428
        %s430 = smul.u32 8, %s25
        %v432 = vld [vmem:[%s409] sm:$0x7]
        %v433 = vld [vmem:[%s409 + $0x4] sm:$0x7]
        %v434 = vld [vmem:[%s409 + $0x8] sm:$0x7]
        %v435 = vld [vmem:[%s409 + $0xc] sm:$0x7]
        %v436 = vld [vmem:[%s409 + $0x10] sm:$0x7]
        %v437 = vld [vmem:[%s414] sm:$0x7]
        %v438 = vld [vmem:[%s414 + $0x4] sm:$0x7]
        %v439 = vld [vmem:[%s414 + $0x8] sm:$0x7]
        %v440 = vld [vmem:[%s414 + $0xc] sm:$0x7]
        %v441 = vld [vmem:[%s414 + $0x10] sm:$0x7]
        %v442 = vld [vmem:[%s419] sm:$0x7]
        %v443 = vld [vmem:[%s419 + $0x4] sm:$0x7]
        %v444 = vld [vmem:[%s419 + $0x8] sm:$0x7]
        %v445 = vld [vmem:[%s419 + $0xc] sm:$0x7]
        %v446 = vld [vmem:[%s419 + $0x10] sm:$0x7]
        %v447 = vld [vmem:[%s424] sm:$0x7]
        %v448 = vld [vmem:[%s424 + $0x4] sm:$0x7]
        %v449 = vld [vmem:[%s424 + $0x8] sm:$0x7]
        %v450 = vld [vmem:[%s424 + $0xc] sm:$0x7]
        %v451 = vld [vmem:[%s424 + $0x10] sm:$0x7]
        %s452 = scalar_lea.vmem %s409, 4
        %v453 = vld [vmem:[%s452] sm:$0x7]
        %v454 = vld [vmem:[%s452 + $0x4] sm:$0x7]
        %v455 = vld [vmem:[%s452 + $0x8] sm:$0x7]
        %v456 = vld [vmem:[%s452 + $0xc] sm:$0x7]
        %v457 = vld [vmem:[%s452 + $0x10] sm:$0x7]
        %s458 = scalar_lea.vmem %s414, 4
        %v459 = vld [vmem:[%s458] sm:$0x7]
        %v460 = vld [vmem:[%s458 + $0x4] sm:$0x7]
        %v461 = vld [vmem:[%s458 + $0x8] sm:$0x7]
        %v462 = vld [vmem:[%s458 + $0xc] sm:$0x7]
        %v463 = vld [vmem:[%s458 + $0x10] sm:$0x7]
        %v464 = vmax.bf16 %v432, %v437
        %v465 = vmax.bf16 %v433, %v438
        %v466 = vmax.bf16 %v434, %v439
        %v467 = vmax.bf16 %v435, %v440
        %v468 = vmax.bf16 %v436, %v441
        %v470 = vshrl.u32 %v432, 16
        %v472 = vrot.slane %v470, 4
        %v473 = vshll.u32 %v432, 16
        %v475 = vrot.slane %v473, 5
        %v476 = vor.u32 %v472, %v475
        %v477 = vrot.slane %v476, 4
        %v479 = vshrl.u32 %v433, 16
        %v481 = vrot.slane %v479, 4
        %v482 = vshll.u32 %v433, 16
        %v484 = vrot.slane %v482, 5
        %v485 = vor.u32 %v481, %v484
        %v486 = vrot.slane %v485, 4
        %v488 = vshrl.u32 %v434, 16
        %v490 = vrot.slane %v488, 4
        %v491 = vshll.u32 %v434, 16
        %v493 = vrot.slane %v491, 5
        %v494 = vor.u32 %v490, %v493
        %v495 = vrot.slane %v494, 4
        %v497 = vshrl.u32 %v435, 16
        %v499 = vrot.slane %v497, 4
        %v500 = vshll.u32 %v435, 16
        %v502 = vrot.slane %v500, 5
        %v503 = vor.u32 %v499, %v502
        %v504 = vrot.slane %v503, 4
        %v506 = vshrl.u32 %v436, 16
        %v508 = vrot.slane %v506, 4
        %v509 = vshll.u32 %v436, 16
        %v511 = vrot.slane %v509, 5
        %v512 = vor.u32 %v508, %v511
        %v513 = vrot.slane %v512, 4
        %v519 = vmax.bf16 %v464, %v477
        %v520 = vmax.bf16 %v465, %v486
        %v521 = vmax.bf16 %v466, %v495
        %v522 = vmax.bf16 %v467, %v504
        %v523 = vmax.bf16 %v468, %v513
        %v524 = vmax.bf16 %v519, %v442
        %v525 = vmax.bf16 %v520, %v443
        %v526 = vmax.bf16 %v521, %v444
        %v527 = vmax.bf16 %v522, %v445
        %v528 = vmax.bf16 %v523, %v446
        %v529 = vmax.bf16 %v524, %v447
        %v530 = vmax.bf16 %v525, %v448
        %v531 = vmax.bf16 %v526, %v449
        %v532 = vmax.bf16 %v527, %v450
        %v533 = vmax.bf16 %v528, %v451
        %v535 = vshrl.u32 %v442, 16
        %v537 = vrot.slane %v535, 4
        %v538 = vshll.u32 %v442, 16
        %v540 = vrot.slane %v538, 5
        %v541 = vor.u32 %v537, %v540
        %v542 = vrot.slane %v541, 4
        %v544 = vshrl.u32 %v443, 16
        %v546 = vrot.slane %v544, 4
        %v547 = vshll.u32 %v443, 16
        %v549 = vrot.slane %v547, 5
        %v550 = vor.u32 %v546, %v549
        %v551 = vrot.slane %v550, 4
        %v553 = vshrl.u32 %v444, 16
        %v555 = vrot.slane %v553, 4
        %v556 = vshll.u32 %v444, 16
        %v558 = vrot.slane %v556, 5
        %v559 = vor.u32 %v555, %v558
        %v560 = vrot.slane %v559, 4
        %v562 = vshrl.u32 %v445, 16
        %v564 = vrot.slane %v562, 4
        %v565 = vshll.u32 %v445, 16
        %v567 = vrot.slane %v565, 5
        %v568 = vor.u32 %v564, %v567
        %v569 = vrot.slane %v568, 4
        %v571 = vshrl.u32 %v446, 16
        %v573 = vrot.slane %v571, 4
        %v574 = vshll.u32 %v446, 16
        %v576 = vrot.slane %v574, 5
        %v577 = vor.u32 %v573, %v576
        %v578 = vrot.slane %v577, 4
        %v584 = vmax.bf16 %v529, %v542
        %v585 = vmax.bf16 %v530, %v551
        %v586 = vmax.bf16 %v531, %v560
        %v587 = vmax.bf16 %v532, %v569
        %v588 = vmax.bf16 %v533, %v578
        %v589 = vmax.bf16 %v584, %v453
        %v590 = vmax.bf16 %v585, %v454
        %v591 = vmax.bf16 %v586, %v455
        %v592 = vmax.bf16 %v587, %v456
        %v593 = vmax.bf16 %v588, %v457
        %v594 = vmax.bf16 %v589, %v459
        %v595 = vmax.bf16 %v590, %v460
        %v596 = vmax.bf16 %v591, %v461
        %v597 = vmax.bf16 %v592, %v462
        %v598 = vmax.bf16 %v593, %v463
        %v600 = vshrl.u32 %v453, 16
        %v602 = vrot.slane %v600, 4
        %v603 = vshll.u32 %v453, 16
        %v605 = vrot.slane %v603, 5
        %v606 = vor.u32 %v602, %v605
        %v607 = vrot.slane %v606, 4
        %v609 = vshrl.u32 %v454, 16
        %v611 = vrot.slane %v609, 4
        %v612 = vshll.u32 %v454, 16
        %v614 = vrot.slane %v612, 5
        %v615 = vor.u32 %v611, %v614
        %v616 = vrot.slane %v615, 4
        %v618 = vshrl.u32 %v455, 16
        %v620 = vrot.slane %v618, 4
        %v621 = vshll.u32 %v455, 16
        %v623 = vrot.slane %v621, 5
        %v624 = vor.u32 %v620, %v623
        %v625 = vrot.slane %v624, 4
        %v627 = vshrl.u32 %v456, 16
        %v629 = vrot.slane %v627, 4
        %v630 = vshll.u32 %v456, 16
        %v632 = vrot.slane %v630, 5
        %v633 = vor.u32 %v629, %v632
        %v634 = vrot.slane %v633, 4
        %v636 = vshrl.u32 %v457, 16
        %v638 = vrot.slane %v636, 4
        %v639 = vshll.u32 %v457, 16
        %v641 = vrot.slane %v639, 5
        %v642 = vor.u32 %v638, %v641
        %v643 = vrot.slane %v642, 4
        %v649 = vmax.bf16 %v594, %v607
        %v650 = vmax.bf16 %v595, %v616
        %v651 = vmax.bf16 %v596, %v625
        %v652 = vmax.bf16 %v597, %v634
        %v653 = vmax.bf16 %v598, %v643
        %v654 = vunpack.c.l.bf16 %v649
        %v655 = vunpack.c.l.bf16 %v650
        %v656 = vunpack.c.l.bf16 %v651
        %v657 = vunpack.c.l.bf16 %v652
        %v658 = vunpack.c.l.bf16 %v653
        %v664 = vrot.slane %v654, 7
        %v665 = vrot.slane %v655, 7
        %v666 = vrot.slane %v656, 7
        %v667 = vrot.slane %v657, 7
        %v668 = vrot.slane %v658, 7
        %vm674 = vcmask 1040384
        %v675 = vsel %vm674, 0.0, %v664
        %v676 = vsel %vm674, 0.0, %v665
        %v677 = vsel %vm674, 0.0, %v666
        %v678 = vsel %vm674, 0.0, %v667
        %v679 = vsel %vm674, 0.0, %v668
        %vm680 = vcmask 1045504
        %v681 = vsel %vm680, %v675, 0.0
        %v682 = vsel %vm680, %v676, 0.0
        %v683 = vsel %vm680, %v677, 0.0
        %v684 = vsel %vm680, %v678, 0.0
        %v685 = vsel %vm680, %v679, 0.0
        %v686 = vpack.c.bf16 %v681, 0.0
        %v687 = vpack.c.bf16 %v683, %v682
        %v688 = vpack.c.bf16 %v685, %v684
        %v689 = vpack.c.bf16 0.0, 0.0
        %v694 = vunpack.c.l.b16 %v686
        %v695 = vunpack.c.h.b16 %v686
        %v696 = vunpack.c.l.b16 %v687
        %v697 = vunpack.c.h.b16 %v687
        %v698 = vunpack.c.l.b16 %v688
        %v699 = vunpack.c.h.b16 %v688
        %v700 = vunpack.c.l.b16 %v689
        %v701 = vunpack.c.h.b16 %v689
        %v702 = vpack.c.b16 %v694, %v694
        %v703 = vpack.c.b16 %v695, %v695
        %v704 = vpack.c.b16 %v696, %v696
        %v705 = vpack.c.b16 %v697, %v697
        %v706 = vpack.c.b16 %v698, %v698
        %v707 = vpack.c.b16 %v699, %v699
        %v708 = vpack.c.b16 %v700, %v700
        %v709 = vpack.c.b16 %v701, %v701
        %vm718 = vcmask 519168
        %719 = vst.msk [vmem:[#allocation2] sm:$0xf] %vm718, %v702
        %720 = vst.msk [vmem:[#allocation2 + $0x4] sm:$0xf] %vm718, %v703
        %721 = vst.msk [vmem:[#allocation2 + $0x8] sm:$0xf] %vm718, %v704
        %722 = vst.msk [vmem:[#allocation2 + $0xc] sm:$0xf] %vm718, %v705
        %723 = vst.msk [vmem:[#allocation2 + $0x10] sm:$0xf] %vm718, %v706
        %724 = vst.msk [vmem:[#allocation2 + $0x14] sm:$0xf] %vm718, %v707
        %725 = vst.msk [vmem:[#allocation2 + $0x18] sm:$0xf] %vm718, %v708
        %726 = vst.msk [vmem:[#allocation2 + $0x1c] sm:$0xf] %vm718, %v709
        %v727 = vlaneseq
        %v728 = vshrl.u32 %v727, 7
        %v729 = vadd.s32 %v728, 8
        %v730 = vadd.s32 %v728, 16
        %v731 = vadd.s32 %v728, 24
        %v732 = vadd.s32 %v728, 32
        %v733 = vadd.s32 %v728, 40
        %v734 = vcvt.s32.f32 %v728
        %v735 = vcvt.s32.f32 %v729
        %v736 = vcvt.s32.f32 %v730
        %v737 = vcvt.s32.f32 %v731
        %v738 = vcvt.s32.f32 %v732
        %v739 = vcvt.s32.f32 %v733
        %v740 = vadd.f32 %v734, 9.0
        %v741 = vadd.f32 %v735, 9.0
        %v742 = vadd.f32 %v736, 9.0
        %v743 = vadd.f32 %v737, 9.0
        %v744 = vadd.f32 %v738, 9.0
        %v745 = vadd.f32 %v739, 9.0
        %v746 = vrcp.pop 64.0
        %v747 = vmul.f32 %v740, %v746
        %v748 = vmul.f32 %v741, %v746
        %v749 = vmul.f32 %v742, %v746
        %v750 = vmul.f32 %v743, %v746
        %v751 = vmul.f32 %v744, %v746
        %v752 = vmul.f32 %v745, %v746
        %v753 = vfloor.f32 %v747
        %v754 = vfloor.f32 %v748
        %v755 = vfloor.f32 %v749
        %v756 = vfloor.f32 %v750
        %v757 = vfloor.f32 %v751
        %v758 = vfloor.f32 %v752
        %v759 = vmul.f32 %v753, 64.0
        %v760 = vmul.f32 %v754, 64.0
        %v761 = vmul.f32 %v755, 64.0
        %v762 = vmul.f32 %v756, 64.0
        %v763 = vmul.f32 %v757, 64.0
        %v764 = vmul.f32 %v758, 64.0
        %v765 = vsub.f32 %v740, %v759
        %v766 = vsub.f32 %v741, %v760
        %v767 = vsub.f32 %v742, %v761
        %v768 = vsub.f32 %v743, %v762
        %v769 = vsub.f32 %v744, %v763
        %v770 = vsub.f32 %v745, %v764
        %v771 = vrcp.pop 8.0
        %v772 = vmul.f32 %v765, %v771
        %v773 = vmul.f32 %v766, %v771
        %v774 = vmul.f32 %v767, %v771
        %v775 = vmul.f32 %v768, %v771
        %v776 = vmul.f32 %v769, %v771
        %v777 = vmul.f32 %v770, %v771
        %v778 = vfloor.f32 %v772
        %v779 = vfloor.f32 %v773
        %v780 = vfloor.f32 %v774
        %v781 = vfloor.f32 %v775
        %v782 = vfloor.f32 %v776
        %v783 = vfloor.f32 %v777
        %v784 = vmul.f32 %v778, 8.0
        %v785 = vmul.f32 %v779, 8.0
        %v786 = vmul.f32 %v780, 8.0
        %v787 = vmul.f32 %v781, 8.0
        %v788 = vmul.f32 %v782, 8.0
        %v789 = vmul.f32 %v783, 8.0
        %v790 = vsub.f32 %v765, %v784
        %v791 = vsub.f32 %v766, %v785
        %v792 = vsub.f32 %v767, %v786
        %v793 = vsub.f32 %v768, %v787
        %v794 = vsub.f32 %v769, %v788
        %v795 = vsub.f32 %v770, %v789
        %vm796 = vcmp.ge.f32.partialorder %v778, 1.0
        %vm797 = vcmp.ge.f32.partialorder %v779, 1.0
        %vm798 = vcmp.ge.f32.partialorder %v780, 1.0
        %vm799 = vcmp.ge.f32.partialorder %v781, 1.0
        %vm800 = vcmp.ge.f32.partialorder %v782, 1.0
        %vm801 = vcmp.ge.f32.partialorder %v783, 1.0
        %vm802 = vcmp.le.f32.partialorder %v778, 5.0
        %vm803 = vcmp.le.f32.partialorder %v779, 5.0
        %vm804 = vcmp.le.f32.partialorder %v780, 5.0
        %vm805 = vcmp.le.f32.partialorder %v781, 5.0
        %vm806 = vcmp.le.f32.partialorder %v782, 5.0
        %vm807 = vcmp.le.f32.partialorder %v783, 5.0
        %vm808 = vmand %vm796, %vm802
        %vm809 = vmand %vm797, %vm803
        %vm810 = vmand %vm798, %vm804
        %vm811 = vmand %vm799, %vm805
        %vm812 = vmand %vm800, %vm806
        %vm813 = vmand %vm801, %vm807
        %vm814 = vcmp.ge.f32.partialorder %v790, 1.0
        %vm815 = vcmp.ge.f32.partialorder %v791, 1.0
        %vm816 = vcmp.ge.f32.partialorder %v792, 1.0
        %vm817 = vcmp.ge.f32.partialorder %v793, 1.0
        %vm818 = vcmp.ge.f32.partialorder %v794, 1.0
        %vm819 = vcmp.ge.f32.partialorder %v795, 1.0
        %vm820 = vmand %vm808, %vm814
        %vm821 = vmand %vm809, %vm815
        %vm822 = vmand %vm810, %vm816
        %vm823 = vmand %vm811, %vm817
        %vm824 = vmand %vm812, %vm818
        %vm825 = vmand %vm813, %vm819
        %vm826 = vcmp.le.f32.partialorder %v790, 5.0
        %vm827 = vcmp.le.f32.partialorder %v791, 5.0
        %vm828 = vcmp.le.f32.partialorder %v792, 5.0
        %vm829 = vcmp.le.f32.partialorder %v793, 5.0
        %vm830 = vcmp.le.f32.partialorder %v794, 5.0
        %vm831 = vcmp.le.f32.partialorder %v795, 5.0
        %vm832 = vmand %vm820, %vm826
        %vm833 = vmand %vm821, %vm827
        %vm834 = vmand %vm822, %vm828
        %vm835 = vmand %vm823, %vm829
        %vm836 = vmand %vm824, %vm830
        %vm837 = vmand %vm825, %vm831
        %v838 = vsel %vm832, 1, 0
        %v839 = vsel %vm833, 1, 0
        %v840 = vsel %vm834, 1, 0
        %v841 = vsel %vm835, 1, 0
        %v842 = vsel %vm836, 1, 0
        %v843 = vsel %vm837, 1, 0
        %v844 = vcvt.s32.f32 %v838
        %v845 = vcvt.s32.f32 %v839
        %v846 = vcvt.s32.f32 %v840
        %v847 = vcvt.s32.f32 %v841
        %v848 = vcvt.s32.f32 %v842
        %v849 = vcvt.s32.f32 %v843
        %v850 = vld [vmem:[#allocation2] sm:$0xf]
        %v851 = vld [vmem:[#allocation2 + $0x4] sm:$0xf]
        %v852 = vld [vmem:[#allocation2 + $0x8] sm:$0xf]
        %v853 = vld [vmem:[#allocation2 + $0xc] sm:$0xf]
        %v854 = vld [vmem:[#allocation2 + $0x10] sm:$0xf]
        %v855 = vld [vmem:[#allocation2 + $0x14] sm:$0xf]
        %v856 = vld [vmem:[%s4] sm:$0xff]
        %v857 = vld [vmem:[%s4 + $0x8] sm:$0xff]
        %v858 = vld [vmem:[%s4 + $0x10] sm:$0xff]
        %v859 = vld [vmem:[%s4 + $0x18] sm:$0xff]
        %v860 = vld [vmem:[%s4 + $0x20] sm:$0xff]
        %v861 = vld [vmem:[%s4 + $0x28] sm:$0xff]
        %v862 = vld [vmem:[%s4 + $0x30] sm:$0xff]
        %v863 = vld [vmem:[%s4 + $0x38] sm:$0xff]
        %v870 = vunpack.c.l.b16 %v850
        %v871 = vunpack.c.l.b16 %v851
        %v872 = vunpack.c.l.b16 %v852
        %v873 = vunpack.c.l.b16 %v853
        %v874 = vunpack.c.l.b16 %v854
        %v875 = vunpack.c.l.b16 %v855
        %v876 = vpack.c.b16 %v871, %v870
        %v877 = vpack.c.b16 %v873, %v872
        %v878 = vpack.c.b16 %v875, %v874
        %v887 = vunpack.c.l.b16 %v856
        %v888 = vunpack.c.h.b16 %v856
        %v889 = vunpack.c.l.b16 %v857
        %v890 = vunpack.c.h.b16 %v857
        %v891 = vunpack.c.l.b16 %v858
        %v892 = vunpack.c.h.b16 %v858
        %v893 = vunpack.c.l.b16 %v859
        %v894 = vunpack.c.h.b16 %v859
        %v895 = vunpack.c.l.b16 %v860
        %v896 = vunpack.c.h.b16 %v860
        %v897 = vunpack.c.l.b16 %v861
        %v898 = vunpack.c.h.b16 %v861
        %v899 = vunpack.c.l.b16 %v862
        %v900 = vunpack.c.h.b16 %v862
        %v901 = vunpack.c.l.b16 %v863
        %v902 = vunpack.c.h.b16 %v863
        %v903 = vpack.c.b16 %v889, %v887
        %v904 = vpack.c.b16 %v890, %v888
        %v905 = vpack.c.b16 %v893, %v891
        %v906 = vpack.c.b16 %v894, %v892
        %v907 = vpack.c.b16 %v897, %v895
        %v908 = vpack.c.b16 %v898, %v896
        %v909 = vpack.c.b16 %v901, %v899
        %v910 = vpack.c.b16 %v902, %v900
        %vm919 = vcmask 523264
        %v921 = vsel %vm919, %v876, 0
        %v924 = vsel %vm919, %v877, 0
        %v927 = vsel %vm919, %v878, 0
        %929 = vmatprep.subr.bf16.mxu0 0
        %930 = vmatpush1.bf16.msra.mxu0 0
        %931 = vmatprep.subr.bf16.mxu0 0
        %932 = vmatpush1.bf16.msra.mxu0 0
        %933 = vmatprep.subr.bf16.mxu0 0
        %934 = vmatpush1.bf16.msra.mxu0 0
        %935 = vmatprep.subr.bf16.mxu0 0
        %936 = vmatpush1.bf16.msra.mxu0 0
        %937 = vmatprep.subr.bf16.mxu0 %v910
        %938 = vmatpush1.bf16.msra.mxu0 %v909
        %939 = vmatprep.subr.bf16.mxu0 %v908
        %940 = vmatpush1.bf16.msra.mxu0 %v907
        %941 = vmatprep.subr.bf16.mxu0 %v906
        %942 = vmatpush1.bf16.msra.mxu0 %v905
        %943 = vmatprep.subr.bf16.mxu0 %v904
        %944 = vmatpush1.bf16.msra.mxu0 %v903
        %945 = vmatprep.subr.bf16.mxu0 0
        %946 = vmatpush2.bf16.msra.mxu0 0
        %947 = vmatprep.subr.bf16.mxu0 0
        %948 = vmatpush2.bf16.msra.mxu0 0
        %949 = vmatprep.subr.bf16.mxu0 0
        %950 = vmatpush2.bf16.msra.mxu0 0
        %951 = vmatprep.subr.bf16.mxu0 0
        %952 = vmatpush2.bf16.msra.mxu0 0
        %953 = vmatprep.subr.bf16.mxu0 0
        %954 = vmatpush2.bf16.msra.mxu0 0
        %955 = vmatprep.subr.bf16.mxu0 0
        %956 = vmatpush2.bf16.msra.mxu0 0
        %957 = vmatprep.subr.bf16.mxu0 0
        %958 = vmatpush2.bf16.msra.mxu0 0
        %959 = vmatprep.subr.bf16.mxu0 0
        %960 = vmatpush2.bf16.msra.mxu0 0
        %961 = vmatprep.mubr.bf16.mxu0 0
        %962 = vmatmul.mubr.bf16.gmra.mxu0 %v921
        %v963 = vpop.f32.mrf.mxu0
        %v964 = vadd.f32 0.0, %v963
        %v965 = vpop.f32.mrf.mxu0
        %v966 = vadd.f32 0.0, %v965
        %v967 = vpop.f32.mrf.mxu0
        %v968 = vadd.f32 0.0, %v967
        %v969 = vpop.f32.mrf.mxu0
        %v970 = vadd.f32 0.0, %v969
        %971 = vmatprep.mubr.bf16.mxu0 0
        %972 = vmatmul.mubr.bf16.gmra.mxu0 %v924
        %v973 = vpop.f32.mrf.mxu0
        %v974 = vadd.f32 0.0, %v973
        %v975 = vpop.f32.mrf.mxu0
        %v976 = vadd.f32 0.0, %v975
        %v977 = vpop.f32.mrf.mxu0
        %v978 = vadd.f32 0.0, %v977
        %v979 = vpop.f32.mrf.mxu0
        %v980 = vadd.f32 0.0, %v979
        %981 = vmatprep.mubr.bf16.mxu0 0
        %982 = vmatmul.mubr.bf16.gmra.mxu0 %v927
        %v983 = vpop.f32.mrf.mxu0
        %v984 = vadd.f32 0.0, %v983
        %v985 = vpop.f32.mrf.mxu0
        %v986 = vadd.f32 0.0, %v985
        %v987 = vpop.f32.mrf.mxu0
        %v988 = vadd.f32 0.0, %v987
        %v989 = vpop.f32.mrf.mxu0
        %v990 = vadd.f32 0.0, %v989
        %991 = vdwg.mxu0
        %v992 = vadd.f32 %v964, 0.0
        %v993 = vadd.f32 %v968, 0.0
        %v994 = vadd.f32 %v974, 0.0
        %v995 = vadd.f32 %v978, 0.0
        %v996 = vadd.f32 %v984, 0.0
        %v997 = vadd.f32 %v988, 0.0
        %vm1004 = vcmask 1046528
        %v1005 = vrot.slane %v964, 1
        %v1006 = vrot.slane %v968, 1
        %v1007 = vsel %vm1004, %v1005, %v1006
        %v1008 = vrot.slane %v974, 1
        %v1009 = vsel %vm1004, %v1006, %v1008
        %v1010 = vrot.slane %v978, 1
        %v1011 = vsel %vm1004, %v1008, %v1010
        %v1012 = vrot.slane %v984, 1
        %v1013 = vsel %vm1004, %v1010, %v1012
        %v1014 = vrot.slane %v988, 1
        %v1015 = vsel %vm1004, %v1012, %v1014
        %1016 = vrot.lane.b32.xlu0 %v1007, 64
        %v1017 = vpop.permute.xlu0 %1016
        %1018 = vrot.lane.b32.xlu0 %v1009, 64
        %v1019 = vpop.permute.xlu0 %1018
        %1020 = vrot.lane.b32.xlu0 %v1011, 64
        %v1021 = vpop.permute.xlu0 %1020
        %1022 = vrot.lane.b32.xlu0 %v1013, 64
        %v1023 = vpop.permute.xlu0 %1022
        %1024 = vrot.lane.b32.xlu0 %v1015, 64
        %v1025 = vpop.permute.xlu0 %1024
        %1026 = vrot.lane.b32.xlu0 %v1014, 64
        %v1027 = vpop.permute.xlu0 %1026
        %v1034 = vadd.f32 %v992, %v1017
        %v1035 = vadd.f32 %v993, %v1019
        %v1036 = vadd.f32 %v994, %v1021
        %v1037 = vadd.f32 %v995, %v1023
        %v1038 = vadd.f32 %v996, %v1025
        %v1039 = vadd.f32 %v997, %v1027
        %v1046 = vrot.slane %v966, 2
        %v1047 = vrot.slane %v970, 2
        %v1048 = vsel %vm680, %v1046, %v1047
        %v1049 = vrot.slane %v976, 2
        %v1050 = vsel %vm680, %v1047, %v1049
        %v1051 = vrot.slane %v980, 2
        %v1052 = vsel %vm680, %v1049, %v1051
        %v1053 = vrot.slane %v986, 2
        %v1054 = vsel %vm680, %v1051, %v1053
        %v1055 = vrot.slane %v990, 2
        %v1056 = vsel %vm680, %v1053, %v1055
        %v1063 = vadd.f32 %v1034, %v1048
        %v1064 = vadd.f32 %v1035, %v1050
        %v1065 = vadd.f32 %v1036, %v1052
        %v1066 = vadd.f32 %v1037, %v1054
        %v1067 = vadd.f32 %v1038, %v1056
        %v1068 = vadd.f32 %v1039, %v1055
        %v1069 = vld [vmem:[#allocation2 + $0x4] sm:$0xf]
        %v1070 = vld [vmem:[#allocation2 + $0x8] sm:$0xf]
        %v1071 = vld [vmem:[#allocation2 + $0xc] sm:$0xf]
        %v1072 = vld [vmem:[#allocation2 + $0x10] sm:$0xf]
        %v1073 = vld [vmem:[#allocation2 + $0x14] sm:$0xf]
        %v1074 = vld [vmem:[#allocation2 + $0x18] sm:$0xf]
        %v1075 = vld [vmem:[%s4 + $0x40] sm:$0xff]
        %v1076 = vld [vmem:[%s4 + $0x48] sm:$0xff]
        %v1077 = vld [vmem:[%s4 + $0x50] sm:$0xff]
        %v1078 = vld [vmem:[%s4 + $0x58] sm:$0xff]
        %v1079 = vld [vmem:[%s4 + $0x60] sm:$0xff]
        %v1080 = vld [vmem:[%s4 + $0x68] sm:$0xff]
        %v1081 = vld [vmem:[%s4 + $0x70] sm:$0xff]
        %v1082 = vld [vmem:[%s4 + $0x78] sm:$0xff]
        %v1089 = vunpack.c.l.b16 %v1069
        %v1090 = vunpack.c.l.b16 %v1070
        %v1091 = vunpack.c.l.b16 %v1071
        %v1092 = vunpack.c.l.b16 %v1072
        %v1093 = vunpack.c.l.b16 %v1073
        %v1094 = vunpack.c.l.b16 %v1074
        %v1095 = vpack.c.b16 %v1090, %v1089
        %v1096 = vpack.c.b16 %v1092, %v1091
        %v1097 = vpack.c.b16 %v1094, %v1093
        %v1106 = vunpack.c.l.b16 %v1075
        %v1107 = vunpack.c.h.b16 %v1075
        %v1108 = vunpack.c.l.b16 %v1076
        %v1109 = vunpack.c.h.b16 %v1076
        %v1110 = vunpack.c.l.b16 %v1077
        %v1111 = vunpack.c.h.b16 %v1077
        %v1112 = vunpack.c.l.b16 %v1078
        %v1113 = vunpack.c.h.b16 %v1078
        %v1114 = vunpack.c.l.b16 %v1079
        %v1115 = vunpack.c.h.b16 %v1079
        %v1116 = vunpack.c.l.b16 %v1080
        %v1117 = vunpack.c.h.b16 %v1080
        %v1118 = vunpack.c.l.b16 %v1081
        %v1119 = vunpack.c.h.b16 %v1081
        %v1120 = vunpack.c.l.b16 %v1082
        %v1121 = vunpack.c.h.b16 %v1082
        %v1122 = vpack.c.b16 %v1108, %v1106
        %v1123 = vpack.c.b16 %v1109, %v1107
        %v1124 = vpack.c.b16 %v1112, %v1110
        %v1125 = vpack.c.b16 %v1113, %v1111
        %v1126 = vpack.c.b16 %v1116, %v1114
        %v1127 = vpack.c.b16 %v1117, %v1115
        %v1128 = vpack.c.b16 %v1120, %v1118
        %v1129 = vpack.c.b16 %v1121, %v1119
        %v1139 = vsel %vm919, %v1095, 0
        %v1142 = vsel %vm919, %v1096, 0
        %v1145 = vsel %vm919, %v1097, 0
        %1147 = vmatprep.subr.bf16.mxu0 0
        %1148 = vmatpush1.bf16.msra.mxu0 0
        %1149 = vmatprep.subr.bf16.mxu0 0
        %1150 = vmatpush1.bf16.msra.mxu0 0
        %1151 = vmatprep.subr.bf16.mxu0 0
        %1152 = vmatpush1.bf16.msra.mxu0 0
        %1153 = vmatprep.subr.bf16.mxu0 0
        %1154 = vmatpush1.bf16.msra.mxu0 0
        %1155 = vmatprep.subr.bf16.mxu0 %v1129
        %1156 = vmatpush1.bf16.msra.mxu0 %v1128
        %1157 = vmatprep.subr.bf16.mxu0 %v1127
        %1158 = vmatpush1.bf16.msra.mxu0 %v1126
        %1159 = vmatprep.subr.bf16.mxu0 %v1125
        %1160 = vmatpush1.bf16.msra.mxu0 %v1124
        %1161 = vmatprep.subr.bf16.mxu0 %v1123
        %1162 = vmatpush1.bf16.msra.mxu0 %v1122
        %1163 = vmatprep.subr.bf16.mxu0 0
        %1164 = vmatpush2.bf16.msra.mxu0 0
        %1165 = vmatprep.subr.bf16.mxu0 0
        %1166 = vmatpush2.bf16.msra.mxu0 0
        %1167 = vmatprep.subr.bf16.mxu0 0
        %1168 = vmatpush2.bf16.msra.mxu0 0
        %1169 = vmatprep.subr.bf16.mxu0 0
        %1170 = vmatpush2.bf16.msra.mxu0 0
        %1171 = vmatprep.subr.bf16.mxu0 0
        %1172 = vmatpush2.bf16.msra.mxu0 0
        %1173 = vmatprep.subr.bf16.mxu0 0
        %1174 = vmatpush2.bf16.msra.mxu0 0
        %1175 = vmatprep.subr.bf16.mxu0 0
        %1176 = vmatpush2.bf16.msra.mxu0 0
        %1177 = vmatprep.subr.bf16.mxu0 0
        %1178 = vmatpush2.bf16.msra.mxu0 0
        %1179 = vmatprep.mubr.bf16.mxu0 0
        %1180 = vmatmul.mubr.bf16.gmra.mxu0 %v1139
        %v1181 = vpop.f32.mrf.mxu0
        %v1182 = vadd.f32 0.0, %v1181
        %v1183 = vpop.f32.mrf.mxu0
        %v1184 = vadd.f32 0.0, %v1183
        %v1185 = vpop.f32.mrf.mxu0
        %v1186 = vadd.f32 0.0, %v1185
        %v1187 = vpop.f32.mrf.mxu0
        %v1188 = vadd.f32 0.0, %v1187
        %1189 = vmatprep.mubr.bf16.mxu0 0
        %1190 = vmatmul.mubr.bf16.gmra.mxu0 %v1142
        %v1191 = vpop.f32.mrf.mxu0
        %v1192 = vadd.f32 0.0, %v1191
        %v1193 = vpop.f32.mrf.mxu0
        %v1194 = vadd.f32 0.0, %v1193
        %v1195 = vpop.f32.mrf.mxu0
        %v1196 = vadd.f32 0.0, %v1195
        %v1197 = vpop.f32.mrf.mxu0
        %v1198 = vadd.f32 0.0, %v1197
        %1199 = vmatprep.mubr.bf16.mxu0 0
        %1200 = vmatmul.mubr.bf16.gmra.mxu0 %v1145
        %v1201 = vpop.f32.mrf.mxu0
        %v1202 = vadd.f32 0.0, %v1201
        %v1203 = vpop.f32.mrf.mxu0
        %v1204 = vadd.f32 0.0, %v1203
        %v1205 = vpop.f32.mrf.mxu0
        %v1206 = vadd.f32 0.0, %v1205
        %v1207 = vpop.f32.mrf.mxu0
        %v1208 = vadd.f32 0.0, %v1207
        %1209 = vdwg.mxu0
        %v1210 = vadd.f32 %v1063, %v1182
        %v1211 = vadd.f32 %v1064, %v1186
        %v1212 = vadd.f32 %v1065, %v1192
        %v1213 = vadd.f32 %v1066, %v1196
        %v1214 = vadd.f32 %v1067, %v1202
        %v1215 = vadd.f32 %v1068, %v1206
        %v1222 = vrot.slane %v1182, 1
        %v1223 = vrot.slane %v1186, 1
        %v1224 = vsel %vm1004, %v1222, %v1223
        %v1225 = vrot.slane %v1192, 1
        %v1226 = vsel %vm1004, %v1223, %v1225
        %v1227 = vrot.slane %v1196, 1
        %v1228 = vsel %vm1004, %v1225, %v1227
        %v1229 = vrot.slane %v1202, 1
        %v1230 = vsel %vm1004, %v1227, %v1229
        %v1231 = vrot.slane %v1206, 1
        %v1232 = vsel %vm1004, %v1229, %v1231
        %1233 = vrot.lane.b32.xlu0 %v1224, 64
        %v1234 = vpop.permute.xlu0 %1233
        %1235 = vrot.lane.b32.xlu0 %v1226, 64
        %v1236 = vpop.permute.xlu0 %1235
        %1237 = vrot.lane.b32.xlu0 %v1228, 64
        %v1238 = vpop.permute.xlu0 %1237
        %1239 = vrot.lane.b32.xlu0 %v1230, 64
        %v1240 = vpop.permute.xlu0 %1239
        %1241 = vrot.lane.b32.xlu0 %v1232, 64
        %v1242 = vpop.permute.xlu0 %1241
        %1243 = vrot.lane.b32.xlu0 %v1231, 64
        %v1244 = vpop.permute.xlu0 %1243
        %v1251 = vadd.f32 %v1210, %v1234
        %v1252 = vadd.f32 %v1211, %v1236
        %v1253 = vadd.f32 %v1212, %v1238
        %v1254 = vadd.f32 %v1213, %v1240
        %v1255 = vadd.f32 %v1214, %v1242
        %v1256 = vadd.f32 %v1215, %v1244
        %v1263 = vrot.slane %v1184, 2
        %v1264 = vrot.slane %v1188, 2
        %v1265 = vsel %vm680, %v1263, %v1264
        %v1266 = vrot.slane %v1194, 2
        %v1267 = vsel %vm680, %v1264, %v1266
        %v1268 = vrot.slane %v1198, 2
        %v1269 = vsel %vm680, %v1266, %v1268
        %v1270 = vrot.slane %v1204, 2
        %v1271 = vsel %vm680, %v1268, %v1270
        %v1272 = vrot.slane %v1208, 2
        %v1273 = vsel %vm680, %v1270, %v1272
        %v1280 = vadd.f32 %v1251, %v1265
        %v1281 = vadd.f32 %v1252, %v1267
        %v1282 = vadd.f32 %v1253, %v1269
        %v1283 = vadd.f32 %v1254, %v1271
        %v1284 = vadd.f32 %v1255, %v1273
        %v1285 = vadd.f32 %v1256, %v1272
        %v1286 = vld [vmem:[#allocation2 + $0x8] sm:$0xf]
        %v1287 = vld [vmem:[#allocation2 + $0xc] sm:$0xf]
        %v1288 = vld [vmem:[#allocation2 + $0x10] sm:$0xf]
        %v1289 = vld [vmem:[#allocation2 + $0x14] sm:$0xf]
        %v1290 = vld [vmem:[#allocation2 + $0x18] sm:$0xf]
        %v1291 = vld [vmem:[#allocation2 + $0x1c] sm:$0xf]
        %v1292 = vld [vmem:[%s4 + $0x80] sm:$0xff]
        %v1293 = vld [vmem:[%s4 + $0x88] sm:$0xff]
        %v1294 = vld [vmem:[%s4 + $0x90] sm:$0xff]
        %v1295 = vld [vmem:[%s4 + $0x98] sm:$0xff]
        %v1296 = vld [vmem:[%s4 + $0xa0] sm:$0xff]
        %v1297 = vld [vmem:[%s4 + $0xa8] sm:$0xff]
        %v1298 = vld [vmem:[%s4 + $0xb0] sm:$0xff]
        %v1299 = vld [vmem:[%s4 + $0xb8] sm:$0xff]
        %v1306 = vunpack.c.l.b16 %v1286
        %v1307 = vunpack.c.l.b16 %v1287
        %v1308 = vunpack.c.l.b16 %v1288
        %v1309 = vunpack.c.l.b16 %v1289
        %v1310 = vunpack.c.l.b16 %v1290
        %v1311 = vunpack.c.l.b16 %v1291
        %v1312 = vpack.c.b16 %v1307, %v1306
        %v1313 = vpack.c.b16 %v1309, %v1308
        %v1314 = vpack.c.b16 %v1311, %v1310
        %v1323 = vunpack.c.l.b16 %v1292
        %v1324 = vunpack.c.h.b16 %v1292
        %v1325 = vunpack.c.l.b16 %v1293
        %v1326 = vunpack.c.h.b16 %v1293
        %v1327 = vunpack.c.l.b16 %v1294
        %v1328 = vunpack.c.h.b16 %v1294
        %v1329 = vunpack.c.l.b16 %v1295
        %v1330 = vunpack.c.h.b16 %v1295
        %v1331 = vunpack.c.l.b16 %v1296
        %v1332 = vunpack.c.h.b16 %v1296
        %v1333 = vunpack.c.l.b16 %v1297
        %v1334 = vunpack.c.h.b16 %v1297
        %v1335 = vunpack.c.l.b16 %v1298
        %v1336 = vunpack.c.h.b16 %v1298
        %v1337 = vunpack.c.l.b16 %v1299
        %v1338 = vunpack.c.h.b16 %v1299
        %v1339 = vpack.c.b16 %v1325, %v1323
        %v1340 = vpack.c.b16 %v1326, %v1324
        %v1341 = vpack.c.b16 %v1329, %v1327
        %v1342 = vpack.c.b16 %v1330, %v1328
        %v1343 = vpack.c.b16 %v1333, %v1331
        %v1344 = vpack.c.b16 %v1334, %v1332
        %v1345 = vpack.c.b16 %v1337, %v1335
        %v1346 = vpack.c.b16 %v1338, %v1336
        %v1356 = vsel %vm919, %v1312, 0
        %v1359 = vsel %vm919, %v1313, 0
        %v1362 = vsel %vm919, %v1314, 0
        %1364 = vmatprep.subr.bf16.mxu0 0
        %1365 = vmatpush1.bf16.msra.mxu0 0
        %1366 = vmatprep.subr.bf16.mxu0 0
        %1367 = vmatpush1.bf16.msra.mxu0 0
        %1368 = vmatprep.subr.bf16.mxu0 0
        %1369 = vmatpush1.bf16.msra.mxu0 0
        %1370 = vmatprep.subr.bf16.mxu0 0
        %1371 = vmatpush1.bf16.msra.mxu0 0
        %1372 = vmatprep.subr.bf16.mxu0 %v1346
        %1373 = vmatpush1.bf16.msra.mxu0 %v1345
        %1374 = vmatprep.subr.bf16.mxu0 %v1344
        %1375 = vmatpush1.bf16.msra.mxu0 %v1343
        %1376 = vmatprep.subr.bf16.mxu0 %v1342
        %1377 = vmatpush1.bf16.msra.mxu0 %v1341
        %1378 = vmatprep.subr.bf16.mxu0 %v1340
        %1379 = vmatpush1.bf16.msra.mxu0 %v1339
        %1380 = vmatprep.subr.bf16.mxu0 0
        %1381 = vmatpush2.bf16.msra.mxu0 0
        %1382 = vmatprep.subr.bf16.mxu0 0
        %1383 = vmatpush2.bf16.msra.mxu0 0
        %1384 = vmatprep.subr.bf16.mxu0 0
        %1385 = vmatpush2.bf16.msra.mxu0 0
        %1386 = vmatprep.subr.bf16.mxu0 0
        %1387 = vmatpush2.bf16.msra.mxu0 0
        %1388 = vmatprep.subr.bf16.mxu0 0
        %1389 = vmatpush2.bf16.msra.mxu0 0
        %1390 = vmatprep.subr.bf16.mxu0 0
        %1391 = vmatpush2.bf16.msra.mxu0 0
        %1392 = vmatprep.subr.bf16.mxu0 0
        %1393 = vmatpush2.bf16.msra.mxu0 0
        %1394 = vmatprep.subr.bf16.mxu0 0
        %1395 = vmatpush2.bf16.msra.mxu0 0
        %1396 = vmatprep.mubr.bf16.mxu0 0
        %1397 = vmatmul.mubr.bf16.gmra.mxu0 %v1356
        %v1398 = vpop.f32.mrf.mxu0
        %v1399 = vadd.f32 0.0, %v1398
        %v1400 = vpop.f32.mrf.mxu0
        %v1401 = vadd.f32 0.0, %v1400
        %v1402 = vpop.f32.mrf.mxu0
        %v1403 = vadd.f32 0.0, %v1402
        %v1404 = vpop.f32.mrf.mxu0
        %v1405 = vadd.f32 0.0, %v1404
        %1406 = vmatprep.mubr.bf16.mxu0 0
        %1407 = vmatmul.mubr.bf16.gmra.mxu0 %v1359
        %v1408 = vpop.f32.mrf.mxu0
        %v1409 = vadd.f32 0.0, %v1408
        %v1410 = vpop.f32.mrf.mxu0
        %v1411 = vadd.f32 0.0, %v1410
        %v1412 = vpop.f32.mrf.mxu0
        %v1413 = vadd.f32 0.0, %v1412
        %v1414 = vpop.f32.mrf.mxu0
        %v1415 = vadd.f32 0.0, %v1414
        %1416 = vmatprep.mubr.bf16.mxu0 0
        %1417 = vmatmul.mubr.bf16.gmra.mxu0 %v1362
        %v1418 = vpop.f32.mrf.mxu0
        %v1419 = vadd.f32 0.0, %v1418
        %v1420 = vpop.f32.mrf.mxu0
        %v1421 = vadd.f32 0.0, %v1420
        %v1422 = vpop.f32.mrf.mxu0
        %v1423 = vadd.f32 0.0, %v1422
        %v1424 = vpop.f32.mrf.mxu0
        %v1425 = vadd.f32 0.0, %v1424
        %1426 = vdwg.mxu0
        %v1427 = vadd.f32 %v1280, %v1399
        %v1428 = vadd.f32 %v1281, %v1403
        %v1429 = vadd.f32 %v1282, %v1409
        %v1430 = vadd.f32 %v1283, %v1413
        %v1431 = vadd.f32 %v1284, %v1419
        %v1432 = vadd.f32 %v1285, %v1423
        %v1439 = vrot.slane %v1399, 1
        %v1440 = vrot.slane %v1403, 1
        %v1441 = vsel %vm1004, %v1439, %v1440
        %v1442 = vrot.slane %v1409, 1
        %v1443 = vsel %vm1004, %v1440, %v1442
        %v1444 = vrot.slane %v1413, 1
        %v1445 = vsel %vm1004, %v1442, %v1444
        %v1446 = vrot.slane %v1419, 1
        %v1447 = vsel %vm1004, %v1444, %v1446
        %v1448 = vrot.slane %v1423, 1
        %v1449 = vsel %vm1004, %v1446, %v1448
        %1450 = vrot.lane.b32.xlu0 %v1441, 64
        %v1451 = vpop.permute.xlu0 %1450
        %1452 = vrot.lane.b32.xlu0 %v1443, 64
        %v1453 = vpop.permute.xlu0 %1452
        %1454 = vrot.lane.b32.xlu0 %v1445, 64
        %v1455 = vpop.permute.xlu0 %1454
        %1456 = vrot.lane.b32.xlu0 %v1447, 64
        %v1457 = vpop.permute.xlu0 %1456
        %1458 = vrot.lane.b32.xlu0 %v1449, 64
        %v1459 = vpop.permute.xlu0 %1458
        %1460 = vrot.lane.b32.xlu0 %v1448, 64
        %v1461 = vpop.permute.xlu0 %1460
        %v1468 = vadd.f32 %v1427, %v1451
        %v1469 = vadd.f32 %v1428, %v1453
        %v1470 = vadd.f32 %v1429, %v1455
        %v1471 = vadd.f32 %v1430, %v1457
        %v1472 = vadd.f32 %v1431, %v1459
        %v1473 = vadd.f32 %v1432, %v1461
        %v1480 = vrot.slane %v1401, 2
        %v1481 = vrot.slane %v1405, 2
        %v1482 = vsel %vm680, %v1480, %v1481
        %v1483 = vrot.slane %v1411, 2
        %v1484 = vsel %vm680, %v1481, %v1483
        %v1485 = vrot.slane %v1415, 2
        %v1486 = vsel %vm680, %v1483, %v1485
        %v1487 = vrot.slane %v1421, 2
        %v1488 = vsel %vm680, %v1485, %v1487
        %v1489 = vrot.slane %v1425, 2
        %v1490 = vsel %vm680, %v1487, %v1489
        %v1497 = vadd.f32 %v1468, %v1482
        %v1498 = vadd.f32 %v1469, %v1484
        %v1499 = vadd.f32 %v1470, %v1486
        %v1500 = vadd.f32 %v1471, %v1488
        %v1501 = vadd.f32 %v1472, %v1490
        %v1502 = vadd.f32 %v1473, %v1489
        %v1503 = vmax.f32 %v1497, 0.0
        %v1504 = vmax.f32 %v1498, 0.0
        %v1505 = vmax.f32 %v1499, 0.0
        %v1506 = vmax.f32 %v1500, 0.0
        %v1507 = vmax.f32 %v1501, 0.0
        %v1508 = vmax.f32 %v1502, 0.0
        %v1509 = vmul.f32 %v1503, %v844
        %v1510 = vmul.f32 %v1504, %v845
        %v1511 = vmul.f32 %v1505, %v846
        %v1512 = vmul.f32 %v1506, %v847
        %v1513 = vmul.f32 %v1507, %v848
        %v1514 = vmul.f32 %v1508, %v849
        %v1521 = vrot.slane %v1509, 7
        %v1522 = vrot.slane %v1510, 7
        %v1523 = vsel %vm674, %v1521, %v1522
        %v1524 = vrot.slane %v1511, 7
        %v1525 = vsel %vm674, %v1522, %v1524
        %v1526 = vrot.slane %v1512, 7
        %v1527 = vsel %vm674, %v1524, %v1526
        %v1528 = vrot.slane %v1513, 7
        %v1529 = vsel %vm674, %v1526, %v1528
        %v1530 = vrot.slane %v1514, 7
        %v1531 = vsel %vm674, %v1528, %v1530
        %v1538 = vsel %vm674, 0.0, %v1521
        %v1539 = vsel %vm1004, %v1531, 0.0
        %v1540 = vpack.c.bf16 %v1538, 0.0
        %v1541 = vpack.c.bf16 %v1525, %v1523
        %v1542 = vpack.c.bf16 %v1529, %v1527
        %v1543 = vpack.c.bf16 0.0, %v1539
        %v1548 = vunpack.c.l.b16 %v1540
        %v1549 = vunpack.c.h.b16 %v1540
        %v1550 = vunpack.c.l.b16 %v1541
        %v1551 = vunpack.c.h.b16 %v1541
        %v1552 = vunpack.c.l.b16 %v1542
        %v1553 = vunpack.c.h.b16 %v1542
        %v1554 = vunpack.c.l.b16 %v1543
        %v1555 = vunpack.c.h.b16 %v1543
        %v1556 = vpack.c.b16 %v1548, %v1548
        %v1557 = vpack.c.b16 %v1549, %v1549
        %v1558 = vpack.c.b16 %v1550, %v1550
        %v1559 = vpack.c.b16 %v1551, %v1551
        %v1560 = vpack.c.b16 %v1552, %v1552
        %v1561 = vpack.c.b16 %v1553, %v1553
        %v1562 = vpack.c.b16 %v1554, %v1554
        %v1563 = vpack.c.b16 %v1555, %v1555
        %1572 = vst.msk [vmem:[#allocation3] sm:$0xf] %vm718, %v1556
        %1573 = vst.msk [vmem:[#allocation3 + $0x4] sm:$0xf] %vm718, %v1557
        %1574 = vst.msk [vmem:[#allocation3 + $0x8] sm:$0xf] %vm718, %v1558
        %1575 = vst.msk [vmem:[#allocation3 + $0xc] sm:$0xf] %vm718, %v1559
        %1576 = vst.msk [vmem:[#allocation3 + $0x10] sm:$0xf] %vm718, %v1560
        %1577 = vst.msk [vmem:[#allocation3 + $0x14] sm:$0xf] %vm718, %v1561
        %1578 = vst.msk [vmem:[#allocation3 + $0x18] sm:$0xf] %vm718, %v1562
        %1579 = vst.msk [vmem:[#allocation3 + $0x1c] sm:$0xf] %vm718, %v1563
        %v1580 = vld [vmem:[#allocation3] sm:$0xf]
        %v1581 = vld [vmem:[#allocation3 + $0x4] sm:$0xf]
        %v1582 = vld [vmem:[#allocation3 + $0x8] sm:$0xf]
        %v1583 = vld [vmem:[#allocation3 + $0xc] sm:$0xf]
        %v1584 = vld [vmem:[#allocation3 + $0x10] sm:$0xf]
        %v1585 = vld [vmem:[#allocation3 + $0x14] sm:$0xf]
        %v1586 = vld [vmem:[%s5] sm:$0xff]
        %v1587 = vld [vmem:[%s5 + $0x8] sm:$0xff]
        %v1588 = vld [vmem:[%s5 + $0x10] sm:$0xff]
        %v1589 = vld [vmem:[%s5 + $0x18] sm:$0xff]
        %v1590 = vld [vmem:[%s5 + $0x20] sm:$0xff]
        %v1591 = vld [vmem:[%s5 + $0x28] sm:$0xff]
        %v1592 = vld [vmem:[%s5 + $0x30] sm:$0xff]
        %v1593 = vld [vmem:[%s5 + $0x38] sm:$0xff]
        %v1600 = vunpack.c.l.b16 %v1580
        %v1601 = vunpack.c.l.b16 %v1581
        %v1602 = vunpack.c.l.b16 %v1582
        %v1603 = vunpack.c.l.b16 %v1583
        %v1604 = vunpack.c.l.b16 %v1584
        %v1605 = vunpack.c.l.b16 %v1585
        %v1606 = vpack.c.b16 %v1601, %v1600
        %v1607 = vpack.c.b16 %v1603, %v1602
        %v1608 = vpack.c.b16 %v1605, %v1604
        %v1617 = vunpack.c.l.b16 %v1586
        %v1618 = vunpack.c.h.b16 %v1586
        %v1619 = vunpack.c.l.b16 %v1587
        %v1620 = vunpack.c.h.b16 %v1587
        %v1621 = vunpack.c.l.b16 %v1588
        %v1622 = vunpack.c.h.b16 %v1588
        %v1623 = vunpack.c.l.b16 %v1589
        %v1624 = vunpack.c.h.b16 %v1589
        %v1625 = vunpack.c.l.b16 %v1590
        %v1626 = vunpack.c.h.b16 %v1590
        %v1627 = vunpack.c.l.b16 %v1591
        %v1628 = vunpack.c.h.b16 %v1591
        %v1629 = vunpack.c.l.b16 %v1592
        %v1630 = vunpack.c.h.b16 %v1592
        %v1631 = vunpack.c.l.b16 %v1593
        %v1632 = vunpack.c.h.b16 %v1593
        %v1633 = vpack.c.b16 %v1619, %v1617
        %v1634 = vpack.c.b16 %v1620, %v1618
        %v1635 = vpack.c.b16 %v1623, %v1621
        %v1636 = vpack.c.b16 %v1624, %v1622
        %v1637 = vpack.c.b16 %v1627, %v1625
        %v1638 = vpack.c.b16 %v1628, %v1626
        %v1639 = vpack.c.b16 %v1631, %v1629
        %v1640 = vpack.c.b16 %v1632, %v1630
        %v1650 = vsel %vm919, %v1606, 0
        %v1653 = vsel %vm919, %v1607, 0
        %v1656 = vsel %vm919, %v1608, 0
        %1658 = vmatprep.subr.bf16.mxu0 0
        %1659 = vmatpush1.bf16.msra.mxu0 0
        %1660 = vmatprep.subr.bf16.mxu0 0
        %1661 = vmatpush1.bf16.msra.mxu0 0
        %1662 = vmatprep.subr.bf16.mxu0 0
        %1663 = vmatpush1.bf16.msra.mxu0 0
        %1664 = vmatprep.subr.bf16.mxu0 0
        %1665 = vmatpush1.bf16.msra.mxu0 0
        %1666 = vmatprep.subr.bf16.mxu0 %v1640
        %1667 = vmatpush1.bf16.msra.mxu0 %v1639
        %1668 = vmatprep.subr.bf16.mxu0 %v1638
        %1669 = vmatpush1.bf16.msra.mxu0 %v1637
        %1670 = vmatprep.subr.bf16.mxu0 %v1636
        %1671 = vmatpush1.bf16.msra.mxu0 %v1635
        %1672 = vmatprep.subr.bf16.mxu0 %v1634
        %1673 = vmatpush1.bf16.msra.mxu0 %v1633
        %1674 = vmatprep.subr.bf16.mxu0 0
        %1675 = vmatpush2.bf16.msra.mxu0 0
        %1676 = vmatprep.subr.bf16.mxu0 0
        %1677 = vmatpush2.bf16.msra.mxu0 0
        %1678 = vmatprep.subr.bf16.mxu0 0
        %1679 = vmatpush2.bf16.msra.mxu0 0
        %1680 = vmatprep.subr.bf16.mxu0 0
        %1681 = vmatpush2.bf16.msra.mxu0 0
        %1682 = vmatprep.subr.bf16.mxu0 0
        %1683 = vmatpush2.bf16.msra.mxu0 0
        %1684 = vmatprep.subr.bf16.mxu0 0
        %1685 = vmatpush2.bf16.msra.mxu0 0
        %1686 = vmatprep.subr.bf16.mxu0 0
        %1687 = vmatpush2.bf16.msra.mxu0 0
        %1688 = vmatprep.subr.bf16.mxu0 0
        %1689 = vmatpush2.bf16.msra.mxu0 0
        %1690 = vmatprep.mubr.bf16.mxu0 0
        %1691 = vmatmul.mubr.bf16.gmra.mxu0 %v1650
        %v1692 = vpop.f32.mrf.mxu0
        %v1693 = vadd.f32 0.0, %v1692
        %v1694 = vpop.f32.mrf.mxu0
        %v1695 = vadd.f32 0.0, %v1694
        %v1696 = vpop.f32.mrf.mxu0
        %v1697 = vadd.f32 0.0, %v1696
        %v1698 = vpop.f32.mrf.mxu0
        %v1699 = vadd.f32 0.0, %v1698
        %1700 = vmatprep.mubr.bf16.mxu0 0
        %1701 = vmatmul.mubr.bf16.gmra.mxu0 %v1653
        %v1702 = vpop.f32.mrf.mxu0
        %v1703 = vadd.f32 0.0, %v1702
        %v1704 = vpop.f32.mrf.mxu0
        %v1705 = vadd.f32 0.0, %v1704
        %v1706 = vpop.f32.mrf.mxu0
        %v1707 = vadd.f32 0.0, %v1706
        %v1708 = vpop.f32.mrf.mxu0
        %v1709 = vadd.f32 0.0, %v1708
        %1710 = vmatprep.mubr.bf16.mxu0 0
        %1711 = vmatmul.mubr.bf16.gmra.mxu0 %v1656
        %v1712 = vpop.f32.mrf.mxu0
        %v1713 = vadd.f32 0.0, %v1712
        %v1714 = vpop.f32.mrf.mxu0
        %v1715 = vadd.f32 0.0, %v1714
        %v1716 = vpop.f32.mrf.mxu0
        %v1717 = vadd.f32 0.0, %v1716
        %v1718 = vpop.f32.mrf.mxu0
        %v1719 = vadd.f32 0.0, %v1718
        %1720 = vdwg.mxu0
        %v1721 = vadd.f32 %v1693, 0.0
        %v1722 = vadd.f32 %v1697, 0.0
        %v1723 = vadd.f32 %v1703, 0.0
        %v1724 = vadd.f32 %v1707, 0.0
        %v1725 = vadd.f32 %v1713, 0.0
        %v1726 = vadd.f32 %v1717, 0.0
        %v1733 = vrot.slane %v1693, 1
        %v1734 = vrot.slane %v1697, 1
        %v1735 = vsel %vm1004, %v1733, %v1734
        %v1736 = vrot.slane %v1703, 1
        %v1737 = vsel %vm1004, %v1734, %v1736
        %v1738 = vrot.slane %v1707, 1
        %v1739 = vsel %vm1004, %v1736, %v1738
        %v1740 = vrot.slane %v1713, 1
        %v1741 = vsel %vm1004, %v1738, %v1740
        %v1742 = vrot.slane %v1717, 1
        %v1743 = vsel %vm1004, %v1740, %v1742
        %1744 = vrot.lane.b32.xlu0 %v1735, 64
        %v1745 = vpop.permute.xlu0 %1744
        %1746 = vrot.lane.b32.xlu0 %v1737, 64
        %v1747 = vpop.permute.xlu0 %1746
        %1748 = vrot.lane.b32.xlu0 %v1739, 64
        %v1749 = vpop.permute.xlu0 %1748
        %1750 = vrot.lane.b32.xlu0 %v1741, 64
        %v1751 = vpop.permute.xlu0 %1750
        %1752 = vrot.lane.b32.xlu0 %v1743, 64
        %v1753 = vpop.permute.xlu0 %1752
        %1754 = vrot.lane.b32.xlu0 %v1742, 64
        %v1755 = vpop.permute.xlu0 %1754
        %v1762 = vadd.f32 %v1721, %v1745
        %v1763 = vadd.f32 %v1722, %v1747
        %v1764 = vadd.f32 %v1723, %v1749
        %v1765 = vadd.f32 %v1724, %v1751
        %v1766 = vadd.f32 %v1725, %v1753
        %v1767 = vadd.f32 %v1726, %v1755
        %v1774 = vrot.slane %v1695, 2
        %v1775 = vrot.slane %v1699, 2
        %v1776 = vsel %vm680, %v1774, %v1775
        %v1777 = vrot.slane %v1705, 2
        %v1778 = vsel %vm680, %v1775, %v1777
        %v1779 = vrot.slane %v1709, 2
        %v1780 = vsel %vm680, %v1777, %v1779
        %v1781 = vrot.slane %v1715, 2
        %v1782 = vsel %vm680, %v1779, %v1781
        %v1783 = vrot.slane %v1719, 2
        %v1784 = vsel %vm680, %v1781, %v1783
        %v1791 = vadd.f32 %v1762, %v1776
        %v1792 = vadd.f32 %v1763, %v1778
        %v1793 = vadd.f32 %v1764, %v1780
        %v1794 = vadd.f32 %v1765, %v1782
        %v1795 = vadd.f32 %v1766, %v1784
        %v1796 = vadd.f32 %v1767, %v1783
        %v1797 = vld [vmem:[#allocation3 + $0x4] sm:$0xf]
        %v1798 = vld [vmem:[#allocation3 + $0x8] sm:$0xf]
        %v1799 = vld [vmem:[#allocation3 + $0xc] sm:$0xf]
        %v1800 = vld [vmem:[#allocation3 + $0x10] sm:$0xf]
        %v1801 = vld [vmem:[#allocation3 + $0x14] sm:$0xf]
        %v1802 = vld [vmem:[#allocation3 + $0x18] sm:$0xf]
        %v1803 = vld [vmem:[%s5 + $0x40] sm:$0xff]
        %v1804 = vld [vmem:[%s5 + $0x48] sm:$0xff]
        %v1805 = vld [vmem:[%s5 + $0x50] sm:$0xff]
        %v1806 = vld [vmem:[%s5 + $0x58] sm:$0xff]
        %v1807 = vld [vmem:[%s5 + $0x60] sm:$0xff]
        %v1808 = vld [vmem:[%s5 + $0x68] sm:$0xff]
        %v1809 = vld [vmem:[%s5 + $0x70] sm:$0xff]
        %v1810 = vld [vmem:[%s5 + $0x78] sm:$0xff]
        %v1817 = vunpack.c.l.b16 %v1797
        %v1818 = vunpack.c.l.b16 %v1798
        %v1819 = vunpack.c.l.b16 %v1799
        %v1820 = vunpack.c.l.b16 %v1800
        %v1821 = vunpack.c.l.b16 %v1801
        %v1822 = vunpack.c.l.b16 %v1802
        %v1823 = vpack.c.b16 %v1818, %v1817
        %v1824 = vpack.c.b16 %v1820, %v1819
        %v1825 = vpack.c.b16 %v1822, %v1821
        %v1834 = vunpack.c.l.b16 %v1803
        %v1835 = vunpack.c.h.b16 %v1803
        %v1836 = vunpack.c.l.b16 %v1804
        %v1837 = vunpack.c.h.b16 %v1804
        %v1838 = vunpack.c.l.b16 %v1805
        %v1839 = vunpack.c.h.b16 %v1805
        %v1840 = vunpack.c.l.b16 %v1806
        %v1841 = vunpack.c.h.b16 %v1806
        %v1842 = vunpack.c.l.b16 %v1807
        %v1843 = vunpack.c.h.b16 %v1807
        %v1844 = vunpack.c.l.b16 %v1808
        %v1845 = vunpack.c.h.b16 %v1808
        %v1846 = vunpack.c.l.b16 %v1809
        %v1847 = vunpack.c.h.b16 %v1809
        %v1848 = vunpack.c.l.b16 %v1810
        %v1849 = vunpack.c.h.b16 %v1810
        %v1850 = vpack.c.b16 %v1836, %v1834
        %v1851 = vpack.c.b16 %v1837, %v1835
        %v1852 = vpack.c.b16 %v1840, %v1838
        %v1853 = vpack.c.b16 %v1841, %v1839
        %v1854 = vpack.c.b16 %v1844, %v1842
        %v1855 = vpack.c.b16 %v1845, %v1843
        %v1856 = vpack.c.b16 %v1848, %v1846
        %v1857 = vpack.c.b16 %v1849, %v1847
        %v1867 = vsel %vm919, %v1823, 0
        %v1870 = vsel %vm919, %v1824, 0
        %v1873 = vsel %vm919, %v1825, 0
        %1875 = vmatprep.subr.bf16.mxu0 0
        %1876 = vmatpush1.bf16.msra.mxu0 0
        %1877 = vmatprep.subr.bf16.mxu0 0
        %1878 = vmatpush1.bf16.msra.mxu0 0
        %1879 = vmatprep.subr.bf16.mxu0 0
        %1880 = vmatpush1.bf16.msra.mxu0 0
        %1881 = vmatprep.subr.bf16.mxu0 0
        %1882 = vmatpush1.bf16.msra.mxu0 0
        %1883 = vmatprep.subr.bf16.mxu0 %v1857
        %1884 = vmatpush1.bf16.msra.mxu0 %v1856
        %1885 = vmatprep.subr.bf16.mxu0 %v1855
        %1886 = vmatpush1.bf16.msra.mxu0 %v1854
        %1887 = vmatprep.subr.bf16.mxu0 %v1853
        %1888 = vmatpush1.bf16.msra.mxu0 %v1852
        %1889 = vmatprep.subr.bf16.mxu0 %v1851
        %1890 = vmatpush1.bf16.msra.mxu0 %v1850
        %1891 = vmatprep.subr.bf16.mxu0 0
        %1892 = vmatpush2.bf16.msra.mxu0 0
        %1893 = vmatprep.subr.bf16.mxu0 0
        %1894 = vmatpush2.bf16.msra.mxu0 0
        %1895 = vmatprep.subr.bf16.mxu0 0
        %1896 = vmatpush2.bf16.msra.mxu0 0
        %1897 = vmatprep.subr.bf16.mxu0 0
        %1898 = vmatpush2.bf16.msra.mxu0 0
        %1899 = vmatprep.subr.bf16.mxu0 0
        %1900 = vmatpush2.bf16.msra.mxu0 0
        %1901 = vmatprep.subr.bf16.mxu0 0
        %1902 = vmatpush2.bf16.msra.mxu0 0
        %1903 = vmatprep.subr.bf16.mxu0 0
        %1904 = vmatpush2.bf16.msra.mxu0 0
        %1905 = vmatprep.subr.bf16.mxu0 0
        %1906 = vmatpush2.bf16.msra.mxu0 0
        %1907 = vmatprep.mubr.bf16.mxu0 0
        %1908 = vmatmul.mubr.bf16.gmra.mxu0 %v1867
        %v1909 = vpop.f32.mrf.mxu0
        %v1910 = vadd.f32 0.0, %v1909
        %v1911 = vpop.f32.mrf.mxu0
        %v1912 = vadd.f32 0.0, %v1911
        %v1913 = vpop.f32.mrf.mxu0
        %v1914 = vadd.f32 0.0, %v1913
        %v1915 = vpop.f32.mrf.mxu0
        %v1916 = vadd.f32 0.0, %v1915
        %1917 = vmatprep.mubr.bf16.mxu0 0
        %1918 = vmatmul.mubr.bf16.gmra.mxu0 %v1870
        %v1919 = vpop.f32.mrf.mxu0
        %v1920 = vadd.f32 0.0, %v1919
        %v1921 = vpop.f32.mrf.mxu0
        %v1922 = vadd.f32 0.0, %v1921
        %v1923 = vpop.f32.mrf.mxu0
        %v1924 = vadd.f32 0.0, %v1923
        %v1925 = vpop.f32.mrf.mxu0
        %v1926 = vadd.f32 0.0, %v1925
        %1927 = vmatprep.mubr.bf16.mxu0 0
        %1928 = vmatmul.mubr.bf16.gmra.mxu0 %v1873
        %v1929 = vpop.f32.mrf.mxu0
        %v1930 = vadd.f32 0.0, %v1929
        %v1931 = vpop.f32.mrf.mxu0
        %v1932 = vadd.f32 0.0, %v1931
        %v1933 = vpop.f32.mrf.mxu0
        %v1934 = vadd.f32 0.0, %v1933
        %v1935 = vpop.f32.mrf.mxu0
        %v1936 = vadd.f32 0.0, %v1935
        %1937 = vdwg.mxu0
        %v1938 = vadd.f32 %v1791, %v1910
        %v1939 = vadd.f32 %v1792, %v1914
        %v1940 = vadd.f32 %v1793, %v1920
        %v1941 = vadd.f32 %v1794, %v1924
        %v1942 = vadd.f32 %v1795, %v1930
        %v1943 = vadd.f32 %v1796, %v1934
        %v1950 = vrot.slane %v1910, 1
        %v1951 = vrot.slane %v1914, 1
        %v1952 = vsel %vm1004, %v1950, %v1951
        %v1953 = vrot.slane %v1920, 1
        %v1954 = vsel %vm1004, %v1951, %v1953
        %v1955 = vrot.slane %v1924, 1
        %v1956 = vsel %vm1004, %v1953, %v1955
        %v1957 = vrot.slane %v1930, 1
        %v1958 = vsel %vm1004, %v1955, %v1957
        %v1959 = vrot.slane %v1934, 1
        %v1960 = vsel %vm1004, %v1957, %v1959
        %1961 = vrot.lane.b32.xlu0 %v1952, 64
        %v1962 = vpop.permute.xlu0 %1961
        %1963 = vrot.lane.b32.xlu0 %v1954, 64
        %v1964 = vpop.permute.xlu0 %1963
        %1965 = vrot.lane.b32.xlu0 %v1956, 64
        %v1966 = vpop.permute.xlu0 %1965
        %1967 = vrot.lane.b32.xlu0 %v1958, 64
        %v1968 = vpop.permute.xlu0 %1967
        %1969 = vrot.lane.b32.xlu0 %v1960, 64
        %v1970 = vpop.permute.xlu0 %1969
        %1971 = vrot.lane.b32.xlu0 %v1959, 64
        %v1972 = vpop.permute.xlu0 %1971
        %v1979 = vadd.f32 %v1938, %v1962
        %v1980 = vadd.f32 %v1939, %v1964
        %v1981 = vadd.f32 %v1940, %v1966
        %v1982 = vadd.f32 %v1941, %v1968
        %v1983 = vadd.f32 %v1942, %v1970
        %v1984 = vadd.f32 %v1943, %v1972
        %v1991 = vrot.slane %v1912, 2
        %v1992 = vrot.slane %v1916, 2
        %v1993 = vsel %vm680, %v1991, %v1992
        %v1994 = vrot.slane %v1922, 2
        %v1995 = vsel %vm680, %v1992, %v1994
        %v1996 = vrot.slane %v1926, 2
        %v1997 = vsel %vm680, %v1994, %v1996
        %v1998 = vrot.slane %v1932, 2
        %v1999 = vsel %vm680, %v1996, %v1998
        %v2000 = vrot.slane %v1936, 2
        %v2001 = vsel %vm680, %v1998, %v2000
        %v2008 = vadd.f32 %v1979, %v1993
        %v2009 = vadd.f32 %v1980, %v1995
        %v2010 = vadd.f32 %v1981, %v1997
        %v2011 = vadd.f32 %v1982, %v1999
        %v2012 = vadd.f32 %v1983, %v2001
        %v2013 = vadd.f32 %v1984, %v2000
        %v2014 = vld [vmem:[#allocation3 + $0x8] sm:$0xf]
        %v2015 = vld [vmem:[#allocation3 + $0xc] sm:$0xf]
        %v2016 = vld [vmem:[#allocation3 + $0x10] sm:$0xf]
        %v2017 = vld [vmem:[#allocation3 + $0x14] sm:$0xf]
        %v2018 = vld [vmem:[#allocation3 + $0x18] sm:$0xf]
        %v2019 = vld [vmem:[#allocation3 + $0x1c] sm:$0xf]
        %v2020 = vld [vmem:[%s5 + $0x80] sm:$0xff]
        %v2021 = vld [vmem:[%s5 + $0x88] sm:$0xff]
        %v2022 = vld [vmem:[%s5 + $0x90] sm:$0xff]
        %v2023 = vld [vmem:[%s5 + $0x98] sm:$0xff]
        %v2024 = vld [vmem:[%s5 + $0xa0] sm:$0xff]
        %v2025 = vld [vmem:[%s5 + $0xa8] sm:$0xff]
        %v2026 = vld [vmem:[%s5 + $0xb0] sm:$0xff]
        %v2027 = vld [vmem:[%s5 + $0xb8] sm:$0xff]
        %v2034 = vunpack.c.l.b16 %v2014
        %v2035 = vunpack.c.l.b16 %v2015
        %v2036 = vunpack.c.l.b16 %v2016
        %v2037 = vunpack.c.l.b16 %v2017
        %v2038 = vunpack.c.l.b16 %v2018
        %v2039 = vunpack.c.l.b16 %v2019
        %v2040 = vpack.c.b16 %v2035, %v2034
        %v2041 = vpack.c.b16 %v2037, %v2036
        %v2042 = vpack.c.b16 %v2039, %v2038
        %v2051 = vunpack.c.l.b16 %v2020
        %v2052 = vunpack.c.h.b16 %v2020
        %v2053 = vunpack.c.l.b16 %v2021
        %v2054 = vunpack.c.h.b16 %v2021
        %v2055 = vunpack.c.l.b16 %v2022
        %v2056 = vunpack.c.h.b16 %v2022
        %v2057 = vunpack.c.l.b16 %v2023
        %v2058 = vunpack.c.h.b16 %v2023
        %v2059 = vunpack.c.l.b16 %v2024
        %v2060 = vunpack.c.h.b16 %v2024
        %v2061 = vunpack.c.l.b16 %v2025
        %v2062 = vunpack.c.h.b16 %v2025
        %v2063 = vunpack.c.l.b16 %v2026
        %v2064 = vunpack.c.h.b16 %v2026
        %v2065 = vunpack.c.l.b16 %v2027
        %v2066 = vunpack.c.h.b16 %v2027
        %v2067 = vpack.c.b16 %v2053, %v2051
        %v2068 = vpack.c.b16 %v2054, %v2052
        %v2069 = vpack.c.b16 %v2057, %v2055
        %v2070 = vpack.c.b16 %v2058, %v2056
        %v2071 = vpack.c.b16 %v2061, %v2059
        %v2072 = vpack.c.b16 %v2062, %v2060
        %v2073 = vpack.c.b16 %v2065, %v2063
        %v2074 = vpack.c.b16 %v2066, %v2064
        %v2084 = vsel %vm919, %v2040, 0
        %v2087 = vsel %vm919, %v2041, 0
        %v2090 = vsel %vm919, %v2042, 0
        %2092 = vmatprep.subr.bf16.mxu0 0
        %2093 = vmatpush1.bf16.msra.mxu0 0
        %2094 = vmatprep.subr.bf16.mxu0 0
        %2095 = vmatpush1.bf16.msra.mxu0 0
        %2096 = vmatprep.subr.bf16.mxu0 0
        %2097 = vmatpush1.bf16.msra.mxu0 0
        %2098 = vmatprep.subr.bf16.mxu0 0
        %2099 = vmatpush1.bf16.msra.mxu0 0
        %2100 = vmatprep.subr.bf16.mxu0 %v2074
        %2101 = vmatpush1.bf16.msra.mxu0 %v2073
        %2102 = vmatprep.subr.bf16.mxu0 %v2072
        %2103 = vmatpush1.bf16.msra.mxu0 %v2071
        %2104 = vmatprep.subr.bf16.mxu0 %v2070
        %2105 = vmatpush1.bf16.msra.mxu0 %v2069
        %2106 = vmatprep.subr.bf16.mxu0 %v2068
        %2107 = vmatpush1.bf16.msra.mxu0 %v2067
        %2108 = vmatprep.subr.bf16.mxu0 0
        %2109 = vmatpush2.bf16.msra.mxu0 0
        %2110 = vmatprep.subr.bf16.mxu0 0
        %2111 = vmatpush2.bf16.msra.mxu0 0
        %2112 = vmatprep.subr.bf16.mxu0 0
        %2113 = vmatpush2.bf16.msra.mxu0 0
        %2114 = vmatprep.subr.bf16.mxu0 0
        %2115 = vmatpush2.bf16.msra.mxu0 0
        %2116 = vmatprep.subr.bf16.mxu0 0
        %2117 = vmatpush2.bf16.msra.mxu0 0
        %2118 = vmatprep.subr.bf16.mxu0 0
        %2119 = vmatpush2.bf16.msra.mxu0 0
        %2120 = vmatprep.subr.bf16.mxu0 0
        %2121 = vmatpush2.bf16.msra.mxu0 0
        %2122 = vmatprep.subr.bf16.mxu0 0
        %2123 = vmatpush2.bf16.msra.mxu0 0
        %2124 = vmatprep.mubr.bf16.mxu0 0
        %2125 = vmatmul.mubr.bf16.gmra.mxu0 %v2084
        %v2126 = vpop.f32.mrf.mxu0
        %v2127 = vadd.f32 0.0, %v2126
        %v2128 = vpop.f32.mrf.mxu0
        %v2129 = vadd.f32 0.0, %v2128
        %v2130 = vpop.f32.mrf.mxu0
        %v2131 = vadd.f32 0.0, %v2130
        %v2132 = vpop.f32.mrf.mxu0
        %v2133 = vadd.f32 0.0, %v2132
        %2134 = vmatprep.mubr.bf16.mxu0 0
        %2135 = vmatmul.mubr.bf16.gmra.mxu0 %v2087
        %v2136 = vpop.f32.mrf.mxu0
        %v2137 = vadd.f32 0.0, %v2136
        %v2138 = vpop.f32.mrf.mxu0
        %v2139 = vadd.f32 0.0, %v2138
        %v2140 = vpop.f32.mrf.mxu0
        %v2141 = vadd.f32 0.0, %v2140
        %v2142 = vpop.f32.mrf.mxu0
        %v2143 = vadd.f32 0.0, %v2142
        %2144 = vmatprep.mubr.bf16.mxu0 0
        %2145 = vmatmul.mubr.bf16.gmra.mxu0 %v2090
        %v2146 = vpop.f32.mrf.mxu0
        %v2147 = vadd.f32 0.0, %v2146
        %v2148 = vpop.f32.mrf.mxu0
        %v2149 = vadd.f32 0.0, %v2148
        %v2150 = vpop.f32.mrf.mxu0
        %v2151 = vadd.f32 0.0, %v2150
        %v2152 = vpop.f32.mrf.mxu0
        %v2153 = vadd.f32 0.0, %v2152
        %2154 = vdwg.mxu0
        %v2155 = vadd.f32 %v2008, %v2127
        %v2156 = vadd.f32 %v2009, %v2131
        %v2157 = vadd.f32 %v2010, %v2137
        %v2158 = vadd.f32 %v2011, %v2141
        %v2159 = vadd.f32 %v2012, %v2147
        %v2160 = vadd.f32 %v2013, %v2151
        %v2167 = vrot.slane %v2127, 1
        %v2168 = vrot.slane %v2131, 1
        %v2169 = vsel %vm1004, %v2167, %v2168
        %v2170 = vrot.slane %v2137, 1
        %v2171 = vsel %vm1004, %v2168, %v2170
        %v2172 = vrot.slane %v2141, 1
        %v2173 = vsel %vm1004, %v2170, %v2172
        %v2174 = vrot.slane %v2147, 1
        %v2175 = vsel %vm1004, %v2172, %v2174
        %v2176 = vrot.slane %v2151, 1
        %v2177 = vsel %vm1004, %v2174, %v2176
        %2178 = vrot.lane.b32.xlu0 %v2169, 64
        %v2179 = vpop.permute.xlu0 %2178
        %2180 = vrot.lane.b32.xlu0 %v2171, 64
        %v2181 = vpop.permute.xlu0 %2180
        %2182 = vrot.lane.b32.xlu0 %v2173, 64
        %v2183 = vpop.permute.xlu0 %2182
        %2184 = vrot.lane.b32.xlu0 %v2175, 64
        %v2185 = vpop.permute.xlu0 %2184
        %2186 = vrot.lane.b32.xlu0 %v2177, 64
        %v2187 = vpop.permute.xlu0 %2186
        %2188 = vrot.lane.b32.xlu0 %v2176, 64
        %v2189 = vpop.permute.xlu0 %2188
        %v2196 = vadd.f32 %v2155, %v2179
        %v2197 = vadd.f32 %v2156, %v2181
        %v2198 = vadd.f32 %v2157, %v2183
        %v2199 = vadd.f32 %v2158, %v2185
        %v2200 = vadd.f32 %v2159, %v2187
        %v2201 = vadd.f32 %v2160, %v2189
        %v2208 = vrot.slane %v2129, 2
        %v2209 = vrot.slane %v2133, 2
        %v2210 = vsel %vm680, %v2208, %v2209
        %v2211 = vrot.slane %v2139, 2
        %v2212 = vsel %vm680, %v2209, %v2211
        %v2213 = vrot.slane %v2143, 2
        %v2214 = vsel %vm680, %v2211, %v2213
        %v2215 = vrot.slane %v2149, 2
        %v2216 = vsel %vm680, %v2213, %v2215
        %v2217 = vrot.slane %v2153, 2
        %v2218 = vsel %vm680, %v2215, %v2217
        %v2225 = vadd.f32 %v2196, %v2210
        %v2226 = vadd.f32 %v2197, %v2212
        %v2227 = vadd.f32 %v2198, %v2214
        %v2228 = vadd.f32 %v2199, %v2216
        %v2229 = vadd.f32 %v2200, %v2218
        %v2230 = vadd.f32 %v2201, %v2217
        %v2231 = vld [vmem:[#allocation2 + $0x4] sm:$0xf]
        %v2232 = vld [vmem:[#allocation2 + $0x8] sm:$0xf]
        %v2233 = vld [vmem:[#allocation2 + $0xc] sm:$0xf]
        %v2234 = vld [vmem:[#allocation2 + $0x10] sm:$0xf]
        %v2235 = vld [vmem:[#allocation2 + $0x14] sm:$0xf]
        %v2236 = vld [vmem:[#allocation2 + $0x18] sm:$0xf]
        %v2237 = vunpack.c.l.bf16 %v2231
        %v2238 = vunpack.c.l.bf16 %v2232
        %v2239 = vunpack.c.l.bf16 %v2233
        %v2240 = vunpack.c.l.bf16 %v2234
        %v2241 = vunpack.c.l.bf16 %v2235
        %v2242 = vunpack.c.l.bf16 %v2236
        %v2243 = vld [vmem:[%s6] sm:$0x1]
        %v2245 = vlaneseq
        %v2246 = vshrl.u32 %v2245, 7
        %v2247 = vsub.s32 0, %v2246
        %v2248 = vrot.slane %v2243, %v2247
        %v2250 = vadd.f32 %v2225, %v2248
        %v2251 = vadd.f32 %v2226, %v2248
        %v2252 = vadd.f32 %v2227, %v2248
        %v2253 = vadd.f32 %v2228, %v2248
        %v2254 = vadd.f32 %v2229, %v2248
        %v2255 = vadd.f32 %v2230, %v2248
        %v2262 = vrot.slane %v2237, 1
        %v2263 = vrot.slane %v2238, 1
        %v2264 = vsel %vm1004, %v2262, %v2263
        %v2265 = vrot.slane %v2239, 1
        %v2266 = vsel %vm1004, %v2263, %v2265
        %v2267 = vrot.slane %v2240, 1
        %v2268 = vsel %vm1004, %v2265, %v2267
        %v2269 = vrot.slane %v2241, 1
        %v2270 = vsel %vm1004, %v2267, %v2269
        %v2271 = vrot.slane %v2242, 1
        %v2272 = vsel %vm1004, %v2269, %v2271
        %v2279 = vadd.f32 %v2250, %v2264
        %v2280 = vadd.f32 %v2251, %v2266
        %v2281 = vadd.f32 %v2252, %v2268
        %v2282 = vadd.f32 %v2253, %v2270
        %v2283 = vadd.f32 %v2254, %v2272
        %v2284 = vadd.f32 %v2255, %v2271
        %v2285 = vmax.f32 %v2279, 0.0
        %v2286 = vmax.f32 %v2280, 0.0
        %v2287 = vmax.f32 %v2281, 0.0
        %v2288 = vmax.f32 %v2282, 0.0
        %v2289 = vmax.f32 %v2283, 0.0
        %v2290 = vmax.f32 %v2284, 0.0
        %v2291 = vmul.f32 %v2285, %v844
        %v2292 = vmul.f32 %v2286, %v845
        %v2293 = vmul.f32 %v2287, %v846
        %v2294 = vmul.f32 %v2288, %v847
        %v2295 = vmul.f32 %v2289, %v848
        %v2296 = vmul.f32 %v2290, %v849
        %v2303 = vrot.slane %v2291, 7
        %v2304 = vrot.slane %v2292, 7
        %v2305 = vsel %vm674, %v2303, %v2304
        %v2306 = vrot.slane %v2293, 7
        %v2307 = vsel %vm674, %v2304, %v2306
        %v2308 = vrot.slane %v2294, 7
        %v2309 = vsel %vm674, %v2306, %v2308
        %v2310 = vrot.slane %v2295, 7
        %v2311 = vsel %vm674, %v2308, %v2310
        %v2312 = vrot.slane %v2296, 7
        %v2313 = vsel %vm674, %v2310, %v2312
        %v2320 = vsel %vm674, 0.0, %v2303
        %v2321 = vsel %vm1004, %v2313, 0.0
        %v2322 = vpack.c.bf16 %v2320, 0.0
        %v2323 = vpack.c.bf16 %v2307, %v2305
        %v2324 = vpack.c.bf16 %v2311, %v2309
        %v2325 = vpack.c.bf16 0.0, %v2321
        %v2330 = vunpack.c.l.b16 %v2322
        %v2331 = vunpack.c.h.b16 %v2322
        %v2332 = vunpack.c.l.b16 %v2323
        %v2333 = vunpack.c.h.b16 %v2323
        %v2334 = vunpack.c.l.b16 %v2324
        %v2335 = vunpack.c.h.b16 %v2324
        %v2336 = vunpack.c.l.b16 %v2325
        %v2337 = vunpack.c.h.b16 %v2325
        %v2338 = vpack.c.b16 %v2330, %v2330
        %v2339 = vpack.c.b16 %v2331, %v2331
        %v2340 = vpack.c.b16 %v2332, %v2332
        %v2341 = vpack.c.b16 %v2333, %v2333
        %v2342 = vpack.c.b16 %v2334, %v2334
        %v2343 = vpack.c.b16 %v2335, %v2335
        %v2344 = vpack.c.b16 %v2336, %v2336
        %v2345 = vpack.c.b16 %v2337, %v2337
        %2354 = vst.msk [vmem:[%s429] sm:$0xf] %vm718, %v2338
        %2355 = vst.msk [vmem:[%s429 + $0x4] sm:$0xf] %vm718, %v2339
        %2356 = vst.msk [vmem:[%s429 + $0x8] sm:$0xf] %vm718, %v2340
        %2357 = vst.msk [vmem:[%s429 + $0xc] sm:$0xf] %vm718, %v2341
        %2358 = vst.msk [vmem:[%s429 + $0x10] sm:$0xf] %vm718, %v2342
        %2359 = vst.msk [vmem:[%s429 + $0x14] sm:$0xf] %vm718, %v2343
        %2360 = vst.msk [vmem:[%s429 + $0x18] sm:$0xf] %vm718, %v2344
        %2361 = vst.msk [vmem:[%s429 + $0x1c] sm:$0xf] %vm718, %v2345
        %v2362 = vsel %vm919, %v2291, 0.0
        %v2363 = vsel %vm919, %v2292, 0.0
        %v2364 = vadd.f32 %v2362, %v2363
        %v2365 = vsel %vm919, %v2293, 0.0
        %v2366 = vadd.f32 %v2364, %v2365
        %v2367 = vsel %vm919, %v2294, 0.0
        %v2368 = vadd.f32 %v2366, %v2367
        %v2369 = vsel %vm919, %v2295, 0.0
        %v2370 = vadd.f32 %v2368, %v2369
        %vm2371 = vcmask 521216
        %v2372 = vsel %vm2371, %v2296, 0.0
        %v2373 = vadd.f32 %v2370, %v2372
        %v2374 = vrot.slane %v2373, 4
        %v2375 = vadd.f32 %v2373, %v2374
        %v2376 = vrot.slane %v2375, 2
        %v2377 = vadd.f32 %v2375, %v2376
        %v2378 = vrot.slane %v2377, 1
        %v2379 = vadd.f32 %v2377, %v2378
        %v2380 = vmul.f32 %v2379, 0.04
        %v2381 = vld [vmem:[%s7] sm:$0xff]
        %v2382 = vld [vmem:[%s7 + $0x8] sm:$0xff]
        %v2383 = vld [vmem:[%s7 + $0x10] sm:$0xff]
        %v2384 = vld [vmem:[%s7 + $0x18] sm:$0xff]
        %v2385 = vld [vmem:[%s7 + $0x20] sm:$0xff]
        %v2386 = vld [vmem:[%s7 + $0x28] sm:$0xff]
        %v2387 = vld [vmem:[%s7 + $0x30] sm:$0xff]
        %v2388 = vld [vmem:[%s7 + $0x38] sm:$0xff]
        %v2389 = vld [vmem:[%s8] sm:$0x1]
        %v2391 = vsel %vm919, %v2380, 0
        %2393 = vmatprep.subr.mxu0 0.0
        %2394 = vmatpush1.msra.mxu0 0.0
        %2395 = vmatprep.subr.mxu0 0.0
        %2396 = vmatpush1.msra.mxu0 0.0
        %2397 = vmatprep.subr.mxu0 0.0
        %2398 = vmatpush1.msra.mxu0 0.0
        %2399 = vmatprep.subr.mxu0 0.0
        %2400 = vmatpush1.msra.mxu0 0.0
        %2401 = vmatprep.subr.mxu0 0.0
        %2402 = vmatpush1.msra.mxu0 0.0
        %2403 = vmatprep.subr.mxu0 0.0
        %2404 = vmatpush1.msra.mxu0 0.0
        %2405 = vmatprep.subr.mxu0 0.0
        %2406 = vmatpush1.msra.mxu0 0.0
        %2407 = vmatprep.subr.mxu0 0.0
        %2408 = vmatpush1.msra.mxu0 0.0
        %2409 = vmatprep.subr.mxu0 0.0
        %2410 = vmatpush1.msra.mxu0 %v2388
        %2411 = vmatprep.subr.mxu0 0.0
        %2412 = vmatpush1.msra.mxu0 %v2387
        %2413 = vmatprep.subr.mxu0 0.0
        %2414 = vmatpush1.msra.mxu0 %v2386
        %2415 = vmatprep.subr.mxu0 0.0
        %2416 = vmatpush1.msra.mxu0 %v2385
        %2417 = vmatprep.subr.mxu0 0.0
        %2418 = vmatpush1.msra.mxu0 %v2384
        %2419 = vmatprep.subr.mxu0 0.0
        %2420 = vmatpush1.msra.mxu0 %v2383
        %2421 = vmatprep.subr.mxu0 0.0
        %2422 = vmatpush1.msra.mxu0 %v2382
        %2423 = vmatprep.subr.mxu0 0.0
        %2424 = vmatpush1.msra.mxu0 %v2381
        %2425 = vmatprep.subr.mxu0 0.0
        %2426 = vmatpush2.msra.mxu0 0.0
        %2427 = vmatprep.subr.mxu0 0.0
        %2428 = vmatpush2.msra.mxu0 0.0
        %2429 = vmatprep.subr.mxu0 0.0
        %2430 = vmatpush2.msra.mxu0 0.0
        %2431 = vmatprep.subr.mxu0 0.0
        %2432 = vmatpush2.msra.mxu0 0.0
        %2433 = vmatprep.subr.mxu0 0.0
        %2434 = vmatpush2.msra.mxu0 0.0
        %2435 = vmatprep.subr.mxu0 0.0
        %2436 = vmatpush2.msra.mxu0 0.0
        %2437 = vmatprep.subr.mxu0 0.0
        %2438 = vmatpush2.msra.mxu0 0.0
        %2439 = vmatprep.subr.mxu0 0.0
        %2440 = vmatpush2.msra.mxu0 0.0
        %2441 = vmatprep.subr.mxu0 0.0
        %2442 = vmatpush2.msra.mxu0 0.0
        %2443 = vmatprep.subr.mxu0 0.0
        %2444 = vmatpush2.msra.mxu0 0.0
        %2445 = vmatprep.subr.mxu0 0.0
        %2446 = vmatpush2.msra.mxu0 0.0
        %2447 = vmatprep.subr.mxu0 0.0
        %2448 = vmatpush2.msra.mxu0 0.0
        %2449 = vmatprep.subr.mxu0 0.0
        %2450 = vmatpush2.msra.mxu0 0.0
        %2451 = vmatprep.subr.mxu0 0.0
        %2452 = vmatpush2.msra.mxu0 0.0
        %2453 = vmatprep.subr.mxu0 0.0
        %2454 = vmatpush2.msra.mxu0 0.0
        %2455 = vmatprep.subr.mxu0 0.0
        %2456 = vmatpush2.msra.mxu0 0.0
        %2457 = vmatprep.mubr.f32.mxu0 0.0
        %2458 = vmatmul.mubr.f32.gmra.mxu0 %v2391
        %v2459 = vpop.f32.mrf.mxu0
        %v2460 = vadd.f32 %v2389, %v2459
        %v2461 = vpop.f32.mrf.mxu0
        %2462 = vdwg.mxu0
        %2463 = vst [vmem:[%s404] sm:$0x1] %v2460
        %s2464 = smul.u32 8, %s25
        %p2465 = scmp.lt.s32.totalorder %s2464, 15
        %s2466 = scalar_select %p2465, %s2464, 15
        %s2467 = smul.addr %s2466, 4
        %s2468 = scalar_lea.vmem %s9, %s2467
        %s2469 = sand.u32 %s268, 1
        %s2470 = scalar_lea.sflag [#allocation5], %s2469
        %s2471 = sand.u32 %s268, 1
        %s2472 = scalar_lea.vmem [#allocation4], %s2471
        // Predicated region
        $region57: #{resnet18_client_forward.3} parent=55 // pred_check
          %p2473 = pneg %p252
        $region58: #{resnet18_client_forward.3} parent=55 // pred_check_branch
          %2475 = sbr.rel (%p2473) target = $region60
        $region59: #{resnet18_client_forward.3} parent=55 // pred_region
          %s2476 = smul.u32 8, %s25
        $region60: #{resnet18_client_forward.3} parent=55 // pred_fallthru
          _
        // Predicated region
        $region61: #{resnet18_client_forward.3} parent=55 // pred_check
          %p2477 = pneg %p278
        $region62: #{resnet18_client_forward.3} parent=55 // pred_check_branch
          %2479 = sbr.rel (%p2477) target = $region64
        $region63: #{resnet18_client_forward.3} parent=55 // pred_region
          %s2481 = ssub.s32 16, 16
          %2482 = vsyncadd %s2470, %s2481
          %s2483 = smul.addr %s25, 16
          %s2484 = scalar_lea.hbm %s10, %s2483
          %s2486 = sshll.u32 %s2472, 4
          %s2487 = int_to_ptr.vmem [resolvable:$true] %s2486
          %2489 = dma.vmem_to_hbm [thread:$0]  %s2487, 16, %s2484, %s2470
        $region64: #{resnet18_client_forward.3} parent=55 // pred_fallthru
          _
      $region56: #{resnet18_client_forward.3} parent=5 // pred_fallthru
        _
      %p2490 = scmp.le.s32.totalorder 2, %s20
      // Predicated region
      $region65: #{resnet18_client_forward.3} parent=5 // pred_check
        %p2491 = pneg %p2490
      $region66: #{resnet18_client_forward.3} parent=5 // pred_check_branch
        %2493 = sbr.rel (%p2491) target = $region68
      $region67: #{resnet18_client_forward.3} parent=5 // pred_region
        %s2494 = ssub.s32 %s20, 2
        // Predicated region
        $region69: #{resnet18_client_forward.3} parent=67 // pred_check
          %p2495 = pneg %p258
        $region70: #{resnet18_client_forward.3} parent=67 // pred_check_branch
          %2497 = sbr.rel (%p2495) target = $region72
        $region71: #{resnet18_client_forward.3} parent=67 // pred_region
          %s2498 = smul.u32 8, %s26
          %p2499 = scmp.lt.s32.totalorder %s2498, 15
          %s2500 = scalar_select %p2499, %s2498, 15
          %s2501 = smul.addr %s2500, 4
          %s2502 = scalar_lea.vmem %s9, %s2501
        $region72: #{resnet18_client_forward.3} parent=67 // pred_fallthru
          _
        // Predicated region
        $region73: #{resnet18_client_forward.3} parent=67 // pred_check
          %p2503 = pneg %p284
        $region74: #{resnet18_client_forward.3} parent=67 // pred_check_branch
          %2505 = sbr.rel (%p2503) target = $region76
        $region75: #{resnet18_client_forward.3} parent=67 // pred_region
          %s2506 = sand.u32 %s269, 1
          %s2507 = scalar_lea.sflag [#allocation5], %s2506
          %s2508 = sand.u32 %s269, 1
          %s2509 = scalar_lea.vmem [#allocation4], %s2508
          %2510 = dma.done %s2507, 16
        $region76: #{resnet18_client_forward.3} parent=67 // pred_fallthru
          _
      $region68: #{resnet18_client_forward.3} parent=5 // pred_fallthru
        _
    $region6: #{resnet18_client_forward.3} parent=1 // loop_footer
      %s24 = sadd.s32 1, %s20
    $region7: #{resnet18_client_forward.3} parent=1 // loop_footer_branch
      %19 = sbr.rel target = $region3
    $region8: #{resnet18_client_forward.3} parent=1 // loop_exit
      _
    %2511 = vsyncpa [#allocation5], 1
    %s2512 = scalar_lea.sflag [#allocation5], 1
    %2513 = vsyncpa %s2512, 1

</llo_original>
